<compile_context>
chip_gen: v7x
topology: tpu7x:2x2x1
jax: 0.10.0
libtpu: 0.0.40
codegen_flags: <defaults>
</compile_context>

<pallas_src>
import jax
import jax.numpy as jnp
from jax.experimental import pallas as pl
from jax.experimental.pallas import tpu as pltpu

HIDDEN = 8           # hidden width of each MLP
H2 = 2 * HIDDEN      # both MLPs stacked
_HP = jax.lax.Precision.HIGHEST


def _coupling_kernel(z_ref, w1_ref, b1_ref, w2_ref, b2_ref, w3_ref, b3_ref,
                     out_ref):
    # z_ref  : (2, TN)   row 0 = z1 (transformed coord), row 1 = z2 (conditioner)
    # w1_ref : (16, 1)   b1_ref : (16, 1)
    # w2_ref : (16, 16)  block-diagonal,  b2_ref : (16, 1)
    # w3_ref : (8, 16)   rows 0/1 = p1/p2 heads, rows 2..7 zero-padded
    # b3_ref : (8, 1)
    # out_ref: (2, TN)   row 0 = x1, row 1 = logJ
    z1 = z_ref[0:1, :]                                           # (1, TN)
    z2 = z_ref[1:2, :]                                           # (1, TN)

    # Layer 1 (both MLPs at once): in_features == 1 -> VPU broadcast multiply.
    h = jnp.maximum(w1_ref[...] * z2 + b1_ref[...], 0.0)        # (16, TN)

    # Layer 2: (16,16) @ (16,TN) on the MXU.
    h = jnp.dot(w2_ref[...], h, precision=_HP,
                preferred_element_type=jnp.float32) + b2_ref[...]
    h = jnp.maximum(h, 0.0)                                      # (16, TN)

    # Layer 3: (8,16) @ (16,TN) on the MXU; rows 0/1 carry the p1/p2 heads.
    a3 = jnp.dot(w3_ref[...], h, precision=_HP,
                 preferred_element_type=jnp.float32) + b3_ref[...]
    p = jnp.tanh(a3[0:2, :])                                     # (2, TN)
    p1 = p[0:1, :]
    p2 = p[1:2, :]

    x1 = p1 + jnp.exp(p2) * z1                                   # (1, TN)
    logj = 2.0 * p2                                              # (1, TN)
    out_ref[...] = jnp.concatenate([x1, logj], axis=0)           # one fused store


def _pack_params(p1_params, p2_params):
    """Stack the two tiny MLPs into one block-diagonal 16-wide parameter set."""
    W1a, b1a, W2a, b2a, W3a, b3a = [jnp.asarray(a, jnp.float32) for a in p1_params]
    W1b, b1b, W2b, b2b, W3b, b3b = [jnp.asarray(a, jnp.float32) for a in p2_params]
    W1s = jnp.concatenate([W1a, W1b], axis=0)                    # (16, 1)
    b1s = jnp.concatenate([b1a, b1b], axis=0)[:, None]           # (16, 1)
    W2s = jnp.zeros((H2, H2), jnp.float32)
    W2s = W2s.at[:HIDDEN, :HIDDEN].set(W2a).at[HIDDEN:, HIDDEN:].set(W2b)
    b2s = jnp.concatenate([b2a, b2b], axis=0)[:, None]           # (16, 1)
    W3s = jnp.zeros((8, H2), jnp.float32)                        # (8, 16) MXU-friendly
    W3s = W3s.at[0, :HIDDEN].set(W3a[0]).at[1, HIDDEN:].set(W3b[0])
    b3s = jnp.zeros((8, 1), jnp.float32)
    b3s = b3s.at[0, 0].set(b3a[0]).at[1, 0].set(b3b[0])
    return W1s, b1s, W2s, b2s, W3s, b3s


def simple_coupling_flow_forward(z, p1_params, p2_params, *,
                                 alternate=False, tile_n=8192):
    """Forward pass of SimpleCouplingFlow.

    z: (N, 2) float32.
    p*_params: (W1 (8,1), b1 (8,), W2 (8,8), b2 (8,), W3 (1,8), b3 (1,)).
    Returns (x (N, 2), logJ (N,)).
    """
    assert tile_n % 128 == 0
    n = z.shape[0]
    z = z.astype(jnp.float32)

    if alternate:
        z1, z2 = z[:, 1], z[:, 0]
    else:
        z1, z2 = z[:, 0], z[:, 1]

    # Tile choice: large tiles amortise the per-grid-step overhead, but cap so
    # the grid keeps >= 2 "parallel" steps (lets v7x shard across both TCs).
    n128 = pl.cdiv(n, 128) * 128
    half = pl.cdiv(pl.cdiv(n128, 2), 128) * 128
    tn = max(128, min(tile_n, half))
    n_pad = pl.cdiv(n, tn) * tn

    # Channel-major (2, n_pad): samples on the 128-wide lane axis.  The pad is
    # folded into the stack (single wrapper-side pass over the data).
    zt = jnp.zeros((2, n_pad), jnp.float32)
    zt = zt.at[:, :n].set(jnp.stack([z1, z2], axis=0))

    W1s, b1s, W2s, b2s, W3s, b3s = _pack_params(p1_params, p2_params)

    grid = (n_pad // tn,)

    def const_spec(shape):
        # Tiny resident parameter block — same block for every grid step.
        return pl.BlockSpec(shape, lambda i: (0, 0))

    out = pl.pallas_call(
        _coupling_kernel,
        out_shape=jax.ShapeDtypeStruct((2, n_pad), jnp.float32),
        grid=grid,
        in_specs=[
            pl.BlockSpec((2, tn), lambda i: (0, i)),             # z tiles
            const_spec((H2, 1)),                                  # W1s
            const_spec((H2, 1)),                                  # b1s
            const_spec((H2, H2)),                                 # W2s
            const_spec((H2, 1)),                                  # b2s
            const_spec((8, H2)),                                  # W3s
            const_spec((8, 1)),                                   # b3s
        ],
        out_specs=pl.BlockSpec((2, tn), lambda i: (0, i)),
        compiler_params=pltpu.CompilerParams(
            dimension_semantics=("parallel",)),
    )(zt, W1s, b1s, W2s, b2s, W3s, b3s)

    x1 = out[0, :n]
    logJ = out[1, :n]
    # Column 0 is always the transformed coordinate, column 1 is x2 == z2,
    # matching torch.stack((x1, x2), dim=-1) for both alternate modes.
    x = jnp.stack([x1, z2], axis=-1)
    return x, logJ


# ------------------------- pure-JAX reference ------------------------------- #

def _mlp_ref(x_col, params):
    W1, b1, W2, b2, W3, b3 = params
    h = jnp.maximum(jnp.dot(x_col, W1.T, precision=_HP) + b1, 0.0)
    h = jnp.maximum(jnp.dot(h, W2.T, precision=_HP) + b2, 0.0)
    return jnp.tanh(jnp.dot(h, W3.T, precision=_HP) + b3)


def _reference_forward(z, p1_params, p2_params, alternate=False):
    if alternate:
        z1, z2 = z[:, 1], z[:, 0]
    else:
        z1, z2 = z[:, 0], z[:, 1]
    p1 = _mlp_ref(z2[:, None], p1_params)[:, 0]
    p2 = _mlp_ref(z2[:, None], p2_params)[:, 0]
    x1 = p1 + jnp.exp(p2) * z1
    logJ = 2.0 * p2
    return jnp.stack([x1, z2], axis=-1), logJ


if __name__ == "__main__":
    key = jax.random.PRNGKey(0)
    k_z, k_p = jax.random.split(key)

    N = 1000  # exercises tail padding (1000 -> 1024) and a 2-step grid

    z = jax.random.normal(k_z, (N, 2), dtype=jnp.float32)

    def init_linear(k, out_f, in_f):
        kw, kb = jax.random.split(k)
        bound = 1.0 / (in_f ** 0.5)
        W = jax.random.uniform(kw, (out_f, in_f), jnp.float32, -bound, bound)
        b = jax.random.uniform(kb, (out_f,), jnp.float32, -bound, bound)
        return W, b

    def init_mlp(k):
        k1, k2, k3 = jax.random.split(k, 3)
        W1, b1 = init_linear(k1, HIDDEN, 1)
        W2, b2 = init_linear(k2, HIDDEN, HIDDEN)
        W3, b3 = init_linear(k3, 1, HIDDEN)
        return (W1, b1, W2, b2, W3, b3)

    kp1, kp2 = jax.random.split(k_p)
    p1_params = init_mlp(kp1)
    p2_params = init_mlp(kp2)

    for alt in (False, True):
        x, logJ = simple_coupling_flow_forward(z, p1_params, p2_params,
                                               alternate=alt)
        x = jax.block_until_ready(x)
        logJ = jax.block_until_ready(logJ)

        x_ref, logJ_ref = _reference_forward(z, p1_params, p2_params,
                                             alternate=alt)

        assert x.shape == (N, 2) and logJ.shape == (N,)
        assert jnp.allclose(x, x_ref, atol=1e-4, rtol=1e-4), \
            (alt, float(jnp.max(jnp.abs(x - x_ref))))
        assert jnp.allclose(logJ, logJ_ref, atol=1e-4, rtol=1e-4), \
            (alt, float(jnp.max(jnp.abs(logJ - logJ_ref))))

    print("KERNEL_OK")
</pallas_src>

<mosaic_0001>
module attributes {stable_mosaic.version = 11 : i64} {
  func.func @_coupling_kernel(%arg0: i32, %arg1: memref<2x512xf32, #tpu.memory_space<vmem>>, %arg2: memref<16x1xf32, #tpu.memory_space<vmem>>, %arg3: memref<16x1xf32, #tpu.memory_space<vmem>>, %arg4: memref<16x16xf32, #tpu.memory_space<vmem>>, %arg5: memref<16x1xf32, #tpu.memory_space<vmem>>, %arg6: memref<8x16xf32, #tpu.memory_space<vmem>>, %arg7: memref<8x1xf32, #tpu.memory_space<vmem>>, %arg8: memref<2x512xf32, #tpu.memory_space<vmem>>) attributes {dimension_semantics = [#tpu.dimension_semantics<parallel>], iteration_bounds = array<i64: 2>, scalar_prefetch = 0 : i64, scratch_operands = 0 : i64, tpu.core_type = #tpu.core_type<tc>, window_params = [{transform_indices = @transform_0, window_bounds = array<i64: 2, 512>}, {pipeline_mode = #tpu.pipeline_mode<synchronous>, transform_indices = @transform_1, window_bounds = array<i64: 16, 1>}, {pipeline_mode = #tpu.pipeline_mode<synchronous>, transform_indices = @transform_2, window_bounds = array<i64: 16, 1>}, {pipeline_mode = #tpu.pipeline_mode<synchronous>, transform_indices = @transform_3, window_bounds = array<i64: 16, 16>}, {pipeline_mode = #tpu.pipeline_mode<synchronous>, transform_indices = @transform_4, window_bounds = array<i64: 16, 1>}, {pipeline_mode = #tpu.pipeline_mode<synchronous>, transform_indices = @transform_5, window_bounds = array<i64: 8, 16>}, {pipeline_mode = #tpu.pipeline_mode<synchronous>, transform_indices = @transform_6, window_bounds = array<i64: 8, 1>}, {transform_indices = @transform_7, window_bounds = array<i64: 2, 512>}]} {
    %c0 = arith.constant 0 : index
    %c0_0 = arith.constant 0 : index
    %0 = vector.load %arg1[%c0, %c0_0] : memref<2x512xf32, #tpu.memory_space<vmem>>, vector<1x512xf32>
    %c1 = arith.constant 1 : index
    %c0_1 = arith.constant 0 : index
    %1 = vector.load %arg1[%c1, %c0_1] : memref<2x512xf32, #tpu.memory_space<vmem>>, vector<1x512xf32>
    %c0_2 = arith.constant 0 : index
    %c0_3 = arith.constant 0 : index
    %2 = vector.load %arg2[%c0_2, %c0_3] : memref<16x1xf32, #tpu.memory_space<vmem>>, vector<16x1xf32>
    %3 = vector.broadcast %2 : vector<16x1xf32> to vector<16x512xf32>
    %4 = vector.broadcast %1 : vector<1x512xf32> to vector<16x512xf32>
    %5 = arith.mulf %3, %4 : vector<16x512xf32>
    %c0_4 = arith.constant 0 : index
    %c0_5 = arith.constant 0 : index
    %6 = vector.load %arg3[%c0_4, %c0_5] : memref<16x1xf32, #tpu.memory_space<vmem>>, vector<16x1xf32>
    %7 = vector.broadcast %6 : vector<16x1xf32> to vector<16x512xf32>
    %8 = arith.addf %5, %7 : vector<16x512xf32>
    %cst = arith.constant 0.000000e+00 : f32
    %9 = vector.broadcast %cst : f32 to vector<16x512xf32>
    %10 = arith.maximumf %8, %9 : vector<16x512xf32>
    %c0_6 = arith.constant 0 : index
    %c0_7 = arith.constant 0 : index
    %11 = vector.load %arg4[%c0_6, %c0_7] : memref<16x16xf32, #tpu.memory_space<vmem>>, vector<16x16xf32>
    %cst_8 = arith.constant dense<0.000000e+00> : vector<16x512xf32>
    %12 = tpu.matmul %11, %10, %cst_8 {dimension_numbers = #tpu.dot_dimension_numbers<[1], [0], [0], [1], [0, 0, 1, 1], [], []>, precision = #tpu.contract_precision<fp32>} : vector<16x16xf32>, vector<16x512xf32>, vector<16x512xf32> -> vector<16x512xf32>
    %c0_9 = arith.constant 0 : index
    %c0_10 = arith.constant 0 : index
    %13 = vector.load %arg5[%c0_9, %c0_10] : memref<16x1xf32, #tpu.memory_space<vmem>>, vector<16x1xf32>
    %14 = vector.broadcast %13 : vector<16x1xf32> to vector<16x512xf32>
    %15 = arith.addf %12, %14 : vector<16x512xf32>
    %cst_11 = arith.constant 0.000000e+00 : f32
    %16 = vector.broadcast %cst_11 : f32 to vector<16x512xf32>
    %17 = arith.maximumf %15, %16 : vector<16x512xf32>
    %c0_12 = arith.constant 0 : index
    %c0_13 = arith.constant 0 : index
    %18 = vector.load %arg6[%c0_12, %c0_13] : memref<8x16xf32, #tpu.memory_space<vmem>>, vector<8x16xf32>
    %cst_14 = arith.constant dense<0.000000e+00> : vector<8x512xf32>
    %19 = tpu.matmul %18, %17, %cst_14 {dimension_numbers = #tpu.dot_dimension_numbers<[1], [0], [0], [1], [0, 0, 1, 1], [], []>, precision = #tpu.contract_precision<fp32>} : vector<8x16xf32>, vector<16x512xf32>, vector<8x512xf32> -> vector<8x512xf32>
    %c0_15 = arith.constant 0 : index
    %c0_16 = arith.constant 0 : index
    %20 = vector.load %arg7[%c0_15, %c0_16] : memref<8x1xf32, #tpu.memory_space<vmem>>, vector<8x1xf32>
    %21 = vector.broadcast %20 : vector<8x1xf32> to vector<8x512xf32>
    %22 = arith.addf %19, %21 : vector<8x512xf32>
    %23 = vector.extract_strided_slice %22 {offsets = [0, 0], sizes = [2, 512], strides = [1, 1]} : vector<8x512xf32> to vector<2x512xf32>
    %24 = math.tanh %23 : vector<2x512xf32>
    %25 = vector.extract_strided_slice %24 {offsets = [0, 0], sizes = [1, 512], strides = [1, 1]} : vector<2x512xf32> to vector<1x512xf32>
    %26 = vector.extract_strided_slice %24 {offsets = [1, 0], sizes = [1, 512], strides = [1, 1]} : vector<2x512xf32> to vector<1x512xf32>
    %27 = math.exp %26 : vector<1x512xf32>
    %28 = arith.mulf %27, %0 : vector<1x512xf32>
    %29 = arith.addf %25, %28 : vector<1x512xf32>
    %cst_17 = arith.constant 2.000000e+00 : f32
    %30 = vector.broadcast %cst_17 : f32 to vector<1x512xf32>
    %31 = arith.mulf %30, %26 : vector<1x512xf32>
    %32 = tpu.concatenate %29, %31 in 0 : vector<1x512xf32>, vector<1x512xf32> -> vector<2x512xf32>
    %c0_18 = arith.constant 0 : index
    %c0_19 = arith.constant 0 : index
    %33 = vector.load %arg8[%c0_18, %c0_19] : memref<2x512xf32, #tpu.memory_space<vmem>>, vector<2x512xf32>
    tpu.vector_store %arg8[%c0_18, %c0_19], %32 {strides = array<i32>} : memref<2x512xf32, #tpu.memory_space<vmem>>, vector<2x512xf32>,
    return
  }
  func.func @transform_0(%arg0: i32) -> (i32, i32) {
    %c0_i32 = arith.constant 0 : i32
    %c0_i32_0 = arith.constant 0 : i32
    return %c0_i32, %arg0 : i32, i32
  }
  func.func @transform_1(%arg0: i32) -> (i32, i32) {
    %c0_i32 = arith.constant 0 : i32
    %c0_i32_0 = arith.constant 0 : i32
    %c0_i32_1 = arith.constant 0 : i32
    return %c0_i32, %c0_i32_0 : i32, i32
  }
  func.func @transform_2(%arg0: i32) -> (i32, i32) {
    %c0_i32 = arith.constant 0 : i32
    %c0_i32_0 = arith.constant 0 : i32
    %c0_i32_1 = arith.constant 0 : i32
    return %c0_i32, %c0_i32_0 : i32, i32
  }
  func.func @transform_3(%arg0: i32) -> (i32, i32) {
    %c0_i32 = arith.constant 0 : i32
    %c0_i32_0 = arith.constant 0 : i32
    %c0_i32_1 = arith.constant 0 : i32
    return %c0_i32, %c0_i32_0 : i32, i32
  }
  func.func @transform_4(%arg0: i32) -> (i32, i32) {
    %c0_i32 = arith.constant 0 : i32
    %c0_i32_0 = arith.constant 0 : i32
    %c0_i32_1 = arith.constant 0 : i32
    return %c0_i32, %c0_i32_0 : i32, i32
  }
  func.func @transform_5(%arg0: i32) -> (i32, i32) {
    %c0_i32 = arith.constant 0 : i32
    %c0_i32_0 = arith.constant 0 : i32
    %c0_i32_1 = arith.constant 0 : i32
    return %c0_i32, %c0_i32_0 : i32, i32
  }
  func.func @transform_6(%arg0: i32) -> (i32, i32) {
    %c0_i32 = arith.constant 0 : i32
    %c0_i32_0 = arith.constant 0 : i32
    %c0_i32_1 = arith.constant 0 : i32
    return %c0_i32, %c0_i32_0 : i32, i32
  }
  func.func @transform_7(%arg0: i32) -> (i32, i32) {
    %c0_i32 = arith.constant 0 : i32
    %c0_i32_0 = arith.constant 0 : i32
    return %c0_i32, %arg0 : i32, i32
  }
}

</mosaic_0001>

<llo_original>
// kernel: tpu_custom_call.1
$region0: #{tpu_custom_call.1}
  #allocation0 [shape = 'u32[]', space=smem, size = 0x4, offset = 0x4, fixed_abs, tag = 'smem constant byte address 0x4 - core index']
  #allocation1 [shape = 'u32[144,128]{1,0:T(1,128)}', space=vmem, size = 0x12000, scoped, tag = 'internal scratch']
  %s0 = inlined_call_operand.vmem [shape: f32[2,1024], index: 0, kind: input, shape index: {}]
  %s1 = inlined_call_operand.vmem [shape: f32[16,1], index: 1, kind: input, shape index: {}]
  %s2 = inlined_call_operand.vmem [shape: f32[16,1], index: 2, kind: input, shape index: {}]
  %s3 = inlined_call_operand.vmem [shape: f32[16,16], index: 3, kind: input, shape index: {}]
  %s4 = inlined_call_operand.vmem [shape: f32[16,1], index: 4, kind: input, shape index: {}]
  %s5 = inlined_call_operand.vmem [shape: f32[8,16], index: 5, kind: input, shape index: {}]
  %s6 = inlined_call_operand.vmem [shape: f32[8,1], index: 6, kind: input, shape index: {}]
  %s7 = inlined_call_operand.hbm [shape: f32[2,1024], index: 7, kind: output, shape index: {}]
  %s8 = sld [smem:[#allocation0]]
  $region61: #{tpu_custom_call.1} parent=0
    _
  %s10 = ssub.s32 1, %s8
  %s11 = scalar_select 0, %s10, %s8
  $region1: #{tpu_custom_call.1} parent=0
    #allocation2 [shape = 'u8[8192]{0}', space=vmem, size = 0x2000, scoped, tag = 'output window, operand 0']
    #allocation3 [shape = 's32[2]{0}', space=sflag, size = 0x8, scoped, tag = 'scoped memory for tpu_custom_call.1']
    %12 = vsyncpa [#allocation3], 0
    %s13 = scalar_lea.sflag [#allocation3], 1
    %14 = vsyncpa %s13, 0
    loop: start=0, step=1, limit=4
    $region2: #{tpu_custom_call.1} parent=1 // loop_pre_header
      _
    $region3: #{tpu_custom_call.1} parent=1 // loop_header
      %s16 = sphi 0, %s20
      %p17 = scmp.ge.s32.totalorder %s16, 4
      %s26 = sphi 0, %s28
      %s29 = sphi 0, %s26
      %s30 = sphi 0, %s29
      %s46 = sphi 0, %s30
      %s50 = sphi 0, %s50
      %s52 = sphi 0, %s50
      %s53 = sphi 0, %s52
      %s67 = sphi 0, %s53
      %s71 = sphi 0, %s71
      %s73 = sphi 0, %s71
      %s74 = sphi 0, %s73
      %s88 = sphi 0, %s74
      %s92 = sphi 0, %s92
      %s94 = sphi 0, %s92
      %s95 = sphi 0, %s94
      %s109 = sphi 0, %s95
      %s113 = sphi 0, %s113
      %s115 = sphi 0, %s113
      %s116 = sphi 0, %s115
      %s130 = sphi 0, %s116
      %s134 = sphi 0, %s134
      %s136 = sphi 0, %s134
      %s137 = sphi 0, %s136
      %s151 = sphi 0, %s137
      %s155 = sphi 0, %s155
      %s157 = sphi 0, %s155
      %s158 = sphi 0, %s157
      %s172 = sphi 0, %s158
      %s178 = sphi 0, %s180
      %s181 = sphi 0, %s178
      %s182 = sphi 0, %s181
      %s198 = sphi 0, %s182
    $region4: #{tpu_custom_call.1} parent=1 // loop_header_branch
      %19 = sbr.rel (%p17) target = $region8
    $region5: #{tpu_custom_call.1} parent=1 // loop_body
      %s21 = ssub.s32 %s16, 1
      %s22 = ssub.s32 %s16, 2
      %s23 = sadd.s32 %s16, 1
      %s24 = ssub.s32 %s16, %s23
      %p25 = scmp.eq.s32.totalorder %s24, 0
      %s27 = sadd.s32 %s26, 1
      %s28 = scalar_select %p25, %s26, %s27
      %p31 = pneg %p25
      %p32 = scmp.eq.s32.totalorder %s16, 1
      %p33 = por %p31, %p32
      %p34 = scmp.ne.s32.totalorder %s26, %s29
      %p35 = scmp.eq.s32.totalorder %s16, 0
      %p36 = por %p34, %p35
      %p37 = scmp.ne.s32.totalorder %s26, %s29
      %p38 = scmp.eq.s32.totalorder %s21, 1
      %p39 = por %p37, %p38
      %p40 = scmp.ne.s32.totalorder %s29, %s30
      %p41 = scmp.eq.s32.totalorder %s21, 0
      %p42 = por %p40, %p41
      %p43 = scmp.ne.s32.totalorder %s29, %s30
      %p44 = scmp.eq.s32.totalorder %s22, 1
      %p45 = por %p43, %p44
      %p47 = scmp.ne.s32.totalorder %s30, %s46
      %p48 = scmp.eq.s32.totalorder %s22, 0
      %p49 = por %p47, %p48
      %s51 = sadd.s32 %s50, 1
      %p54 = scmp.eq.s32.totalorder %s16, 1
      %p55 = scmp.ne.s32.totalorder %s50, %s52
      %p56 = scmp.eq.s32.totalorder %s16, 0
      %p57 = por %p55, %p56
      %p58 = scmp.ne.s32.totalorder %s50, %s52
      %p59 = scmp.eq.s32.totalorder %s21, 1
      %p60 = por %p58, %p59
      %p61 = scmp.ne.s32.totalorder %s52, %s53
      %p62 = scmp.eq.s32.totalorder %s21, 0
      %p63 = por %p61, %p62
      %p64 = scmp.ne.s32.totalorder %s52, %s53
      %p65 = scmp.eq.s32.totalorder %s22, 1
      %p66 = por %p64, %p65
      %p68 = scmp.ne.s32.totalorder %s53, %s67
      %p69 = scmp.eq.s32.totalorder %s22, 0
      %p70 = por %p68, %p69
      %s72 = sadd.s32 %s71, 1
      %p75 = scmp.eq.s32.totalorder %s16, 1
      %p76 = scmp.ne.s32.totalorder %s71, %s73
      %p77 = scmp.eq.s32.totalorder %s16, 0
      %p78 = por %p76, %p77
      %p79 = scmp.ne.s32.totalorder %s71, %s73
      %p80 = scmp.eq.s32.totalorder %s21, 1
      %p81 = por %p79, %p80
      %p82 = scmp.ne.s32.totalorder %s73, %s74
      %p83 = scmp.eq.s32.totalorder %s21, 0
      %p84 = por %p82, %p83
      %p85 = scmp.ne.s32.totalorder %s73, %s74
      %p86 = scmp.eq.s32.totalorder %s22, 1
      %p87 = por %p85, %p86
      %p89 = scmp.ne.s32.totalorder %s74, %s88
      %p90 = scmp.eq.s32.totalorder %s22, 0
      %p91 = por %p89, %p90
      %s93 = sadd.s32 %s92, 1
      %p96 = scmp.eq.s32.totalorder %s16, 1
      %p97 = scmp.ne.s32.totalorder %s92, %s94
      %p98 = scmp.eq.s32.totalorder %s16, 0
      %p99 = por %p97, %p98
      %p100 = scmp.ne.s32.totalorder %s92, %s94
      %p101 = scmp.eq.s32.totalorder %s21, 1
      %p102 = por %p100, %p101
      %p103 = scmp.ne.s32.totalorder %s94, %s95
      %p104 = scmp.eq.s32.totalorder %s21, 0
      %p105 = por %p103, %p104
      %p106 = scmp.ne.s32.totalorder %s94, %s95
      %p107 = scmp.eq.s32.totalorder %s22, 1
      %p108 = por %p106, %p107
      %p110 = scmp.ne.s32.totalorder %s95, %s109
      %p111 = scmp.eq.s32.totalorder %s22, 0
      %p112 = por %p110, %p111
      %s114 = sadd.s32 %s113, 1
      %p117 = scmp.eq.s32.totalorder %s16, 1
      %p118 = scmp.ne.s32.totalorder %s113, %s115
      %p119 = scmp.eq.s32.totalorder %s16, 0
      %p120 = por %p118, %p119
      %p121 = scmp.ne.s32.totalorder %s113, %s115
      %p122 = scmp.eq.s32.totalorder %s21, 1
      %p123 = por %p121, %p122
      %p124 = scmp.ne.s32.totalorder %s115, %s116
      %p125 = scmp.eq.s32.totalorder %s21, 0
      %p126 = por %p124, %p125
      %p127 = scmp.ne.s32.totalorder %s115, %s116
      %p128 = scmp.eq.s32.totalorder %s22, 1
      %p129 = por %p127, %p128
      %p131 = scmp.ne.s32.totalorder %s116, %s130
      %p132 = scmp.eq.s32.totalorder %s22, 0
      %p133 = por %p131, %p132
      %s135 = sadd.s32 %s134, 1
      %p138 = scmp.eq.s32.totalorder %s16, 1
      %p139 = scmp.ne.s32.totalorder %s134, %s136
      %p140 = scmp.eq.s32.totalorder %s16, 0
      %p141 = por %p139, %p140
      %p142 = scmp.ne.s32.totalorder %s134, %s136
      %p143 = scmp.eq.s32.totalorder %s21, 1
      %p144 = por %p142, %p143
      %p145 = scmp.ne.s32.totalorder %s136, %s137
      %p146 = scmp.eq.s32.totalorder %s21, 0
      %p147 = por %p145, %p146
      %p148 = scmp.ne.s32.totalorder %s136, %s137
      %p149 = scmp.eq.s32.totalorder %s22, 1
      %p150 = por %p148, %p149
      %p152 = scmp.ne.s32.totalorder %s137, %s151
      %p153 = scmp.eq.s32.totalorder %s22, 0
      %p154 = por %p152, %p153
      %s156 = sadd.s32 %s155, 1
      %p159 = scmp.eq.s32.totalorder %s16, 1
      %p160 = scmp.ne.s32.totalorder %s155, %s157
      %p161 = scmp.eq.s32.totalorder %s16, 0
      %p162 = por %p160, %p161
      %p163 = scmp.ne.s32.totalorder %s155, %s157
      %p164 = scmp.eq.s32.totalorder %s21, 1
      %p165 = por %p163, %p164
      %p166 = scmp.ne.s32.totalorder %s157, %s158
      %p167 = scmp.eq.s32.totalorder %s21, 0
      %p168 = por %p166, %p167
      %p169 = scmp.ne.s32.totalorder %s157, %s158
      %p170 = scmp.eq.s32.totalorder %s22, 1
      %p171 = por %p169, %p170
      %p173 = scmp.ne.s32.totalorder %s158, %s172
      %p174 = scmp.eq.s32.totalorder %s22, 0
      %p175 = por %p173, %p174
      %s176 = ssub.s32 %s16, %s23
      %p177 = scmp.eq.s32.totalorder %s176, 0
      %s179 = sadd.s32 %s178, 1
      %s180 = scalar_select %p177, %s178, %s179
      %p183 = pneg %p177
      %p184 = scmp.eq.s32.totalorder %s16, 1
      %p185 = por %p183, %p184
      %p186 = scmp.ne.s32.totalorder %s178, %s181
      %p187 = scmp.eq.s32.totalorder %s16, 0
      %p188 = por %p186, %p187
      %p189 = scmp.ne.s32.totalorder %s178, %s181
      %p190 = scmp.eq.s32.totalorder %s21, 1
      %p191 = por %p189, %p190
      %p192 = scmp.ne.s32.totalorder %s181, %s182
      %p193 = scmp.eq.s32.totalorder %s21, 0
      %p194 = por %p192, %p193
      %p195 = scmp.ne.s32.totalorder %s181, %s182
      %p196 = scmp.eq.s32.totalorder %s22, 1
      %p197 = por %p195, %p196
      %p199 = scmp.ne.s32.totalorder %s182, %s198
      %p200 = scmp.eq.s32.totalorder %s22, 0
      %p201 = por %p199, %p200
      %p202 = scmp.le.s32.totalorder 1, %s16
      %p203 = scmp.lt.s32.totalorder %s16, 3
      %p204 = pnand %p202, %p203
      %p205 = pneg %p204
      // Predicated region
      $region9: #{tpu_custom_call.1} parent=5 // pred_check
        _
      $region10: #{tpu_custom_call.1} parent=5 // pred_check_branch
        %207 = sbr.rel (%p204) target = $region12
      $region11: #{tpu_custom_call.1} parent=5 // pred_region
        %s208 = ssub.s32 %s16, 1
        // Predicated region
        $region13: #{tpu_custom_call.1} parent=11 // pred_check
          %p209 = pneg %p63
        $region14: #{tpu_custom_call.1} parent=11 // pred_check_branch
          %211 = sbr.rel (%p209) target = $region16
        $region15: #{tpu_custom_call.1} parent=11 // pred_region
          _
        $region16: #{tpu_custom_call.1} parent=11 // pred_fallthru
          _
        // Predicated region
        $region17: #{tpu_custom_call.1} parent=11 // pred_check
          %p212 = pneg %p84
        $region18: #{tpu_custom_call.1} parent=11 // pred_check_branch
          %214 = sbr.rel (%p212) target = $region20
        $region19: #{tpu_custom_call.1} parent=11 // pred_region
          _
        $region20: #{tpu_custom_call.1} parent=11 // pred_fallthru
          _
        // Predicated region
        $region21: #{tpu_custom_call.1} parent=11 // pred_check
          %p215 = pneg %p105
        $region22: #{tpu_custom_call.1} parent=11 // pred_check_branch
          %217 = sbr.rel (%p215) target = $region24
        $region23: #{tpu_custom_call.1} parent=11 // pred_region
          _
        $region24: #{tpu_custom_call.1} parent=11 // pred_fallthru
          _
        // Predicated region
        $region25: #{tpu_custom_call.1} parent=11 // pred_check
          %p218 = pneg %p126
        $region26: #{tpu_custom_call.1} parent=11 // pred_check_branch
          %220 = sbr.rel (%p218) target = $region28
        $region27: #{tpu_custom_call.1} parent=11 // pred_region
          _
        $region28: #{tpu_custom_call.1} parent=11 // pred_fallthru
          _
        // Predicated region
        $region29: #{tpu_custom_call.1} parent=11 // pred_check
          %p221 = pneg %p147
        $region30: #{tpu_custom_call.1} parent=11 // pred_check_branch
          %223 = sbr.rel (%p221) target = $region32
        $region31: #{tpu_custom_call.1} parent=11 // pred_region
          _
        $region32: #{tpu_custom_call.1} parent=11 // pred_fallthru
          _
        // Predicated region
        $region33: #{tpu_custom_call.1} parent=11 // pred_check
          %p224 = pneg %p168
        $region34: #{tpu_custom_call.1} parent=11 // pred_check_branch
          %226 = sbr.rel (%p224) target = $region36
        $region35: #{tpu_custom_call.1} parent=11 // pred_region
          _
        $region36: #{tpu_custom_call.1} parent=11 // pred_fallthru
          _
      $region12: #{tpu_custom_call.1} parent=5 // pred_fallthru
        _
      %p227 = scmp.lt.s32.totalorder %s16, 2
      // Predicated region
      $region37: #{tpu_custom_call.1} parent=5 // pred_check
        %p228 = pneg %p227
      $region38: #{tpu_custom_call.1} parent=5 // pred_check_branch
        %230 = sbr.rel (%p228) target = $region40
      $region39: #{tpu_custom_call.1} parent=5 // pred_region
        // Predicated region
        $region41: #{tpu_custom_call.1} parent=39 // pred_check
          %p231 = pneg %p36
        $region42: #{tpu_custom_call.1} parent=39 // pred_check_branch
          %233 = sbr.rel (%p231) target = $region44
        $region43: #{tpu_custom_call.1} parent=39 // pred_region
          %s234 = smul.u32 4, %s16
          %p235 = scmp.lt.s32.totalorder %s234, 7
          %s236 = scalar_select %p235, %s234, 7
          %s237 = smul.addr %s236, 2
          %s238 = scalar_lea.vmem %s0, %s237
          %s239 = smul.u32 4, %s16
        $region44: #{tpu_custom_call.1} parent=39 // pred_fallthru
          _
      $region40: #{tpu_custom_call.1} parent=5 // pred_fallthru
        _
      %p240 = scmp.le.s32.totalorder 1, %s16
      %p241 = scmp.lt.s32.totalorder %s16, 3
      %p242 = pnand %p240, %p241
      %p243 = pneg %p242
      // Predicated region
      $region45: #{tpu_custom_call.1} parent=5 // pred_check
        _
      $region46: #{tpu_custom_call.1} parent=5 // pred_check_branch
        %245 = sbr.rel (%p242) target = $region48
      $region47: #{tpu_custom_call.1} parent=5 // pred_region
        %s246 = ssub.s32 %s16, 1
        %s247 = smul.u32 4, %s21
        %p248 = scmp.lt.s32.totalorder %s247, 7
        %s249 = scalar_select %p248, %s247, 7
        %s250 = smul.addr %s249, 2
        %s251 = scalar_lea.vmem %s0, %s250
        %p252 = pneg %p42
        %p253 = pneg %p39
        %p254 = pneg %p63
        %p255 = pneg %p60
        %p256 = pneg %p84
        %p257 = pneg %p81
        %p258 = pneg %p105
        %p259 = pneg %p102
        %p260 = pneg %p126
        %p261 = pneg %p123
        %p262 = pneg %p147
        %p263 = pneg %p144
        %p264 = pneg %p168
        %p265 = pneg %p165
        %p266 = pneg %p194
        %p267 = pneg %p191
        %s268 = sand.u32 %s181, 1
        %s269 = scalar_lea.sflag [#allocation3], %s268
        %s270 = sand.u32 %s181, 1
        %s271 = smul.addr %s270, 8
        %s272 = scalar_lea.vmem [#allocation2], %s271
        %s273 = smul.u32 4, %s21
        %p274 = scmp.lt.s32.totalorder %s273, 7
        %s275 = scalar_select %p274, %s273, 7
        %s276 = smul.addr %s275, 2
        %s277 = scalar_lea.vmem %s0, %s276
        %s278 = smul.u32 4, %s21
        %s279 = smul.u32 4, %s21
        %v280 = vld [vmem:[%s277] ss:$2 sm:$0xf]
        %s281 = scalar_lea.vmem %s277, 1
        %v282 = vld [vmem:[%s281] ss:$2 sm:$0xf]
        %v283 = vld [vmem:[%s1] sm:$0xff]
        %v284 = vld [vmem:[%s1 + $0x8] sm:$0xff]
        %286 = vset.pattern.permute.xlu0 0
        %287 = vperm.xlu0 %286, %v283
        %v288 = vpop.permute.xlu0 %287
        %291 = vset.pattern.permute.xlu0 0
        %292 = vperm.xlu0 %291, %v284
        %v293 = vpop.permute.xlu0 %292
        %v296 = vlaneseq
        %v297 = vshrl.u32 %v296, 7
        %v298 = vsub.s32 0, %v297
        %v299 = vrot.slane %v282, %v298
        %v300 = vlaneseq
        %v301 = vshrl.u32 %v300, 7
        %v302 = vsub.s32 1, %v301
        %v303 = vrot.slane %v282, %v302
        %v304 = vlaneseq
        %v305 = vshrl.u32 %v304, 7
        %v306 = vsub.s32 2, %v305
        %v307 = vrot.slane %v282, %v306
        %v308 = vlaneseq
        %v309 = vshrl.u32 %v308, 7
        %v310 = vsub.s32 3, %v309
        %v311 = vrot.slane %v282, %v310
        %v316 = vmul.f32 %v288, %v299
        %v317 = vmul.f32 %v288, %v303
        %v318 = vmul.f32 %v288, %v307
        %v319 = vmul.f32 %v288, %v311
        %v320 = vmul.f32 %v293, %v299
        %v321 = vmul.f32 %v293, %v303
        %v322 = vmul.f32 %v293, %v307
        %v323 = vmul.f32 %v293, %v311
        %v324 = vld [vmem:[%s2] sm:$0xff]
        %v325 = vld [vmem:[%s2 + $0x8] sm:$0xff]
        %327 = vset.pattern.permute.xlu0 0
        %328 = vperm.xlu0 %327, %v324
        %v329 = vpop.permute.xlu0 %328
        %332 = vset.pattern.permute.xlu0 0
        %333 = vperm.xlu0 %332, %v325
        %v334 = vpop.permute.xlu0 %333
        %v336 = vadd.f32 %v316, %v329
        %v337 = vadd.f32 %v317, %v329
        %v338 = vadd.f32 %v318, %v329
        %v339 = vadd.f32 %v319, %v329
        %v340 = vadd.f32 %v320, %v334
        %v341 = vadd.f32 %v321, %v334
        %v342 = vadd.f32 %v322, %v334
        %v343 = vadd.f32 %v323, %v334
        %v344 = vmax.f32 %v336, 0.0
        %v345 = vmax.f32 %v337, 0.0
        %v346 = vmax.f32 %v338, 0.0
        %v347 = vmax.f32 %v339, 0.0
        %v348 = vmax.f32 %v340, 0.0
        %v349 = vmax.f32 %v341, 0.0
        %v350 = vmax.f32 %v342, 0.0
        %v351 = vmax.f32 %v343, 0.0
        %v352 = vld [vmem:[%s3] sm:$0xff]
        %v353 = vld [vmem:[%s3 + $0x8] sm:$0xff]
        %v354 = vld [vmem:[%s4] sm:$0xff]
        %v355 = vld [vmem:[%s4 + $0x8] sm:$0xff]
        %357 = vset.pattern.permute.xlu0 0
        %358 = vperm.xlu0 %357, %v354
        %v359 = vpop.permute.xlu0 %358
        %362 = vset.pattern.permute.xlu0 0
        %363 = vperm.xlu0 %362, %v355
        %v364 = vpop.permute.xlu0 %363
        %vm366 = vcmask 130048
        %v368 = vsel %vm366, %v352, 0
        %v371 = vsel %vm366, %v353, 0
        %v373 = vand.u32 %v345, 4294901760
        %374 = vmatprep.subr.mxu0 %v373
        %v375 = vand.u32 %v344, 4294901760
        %376 = vmatpush1.msra.mxu0 %v375
        %v377 = vand.u32 %v349, 4294901760
        %378 = vmatprep.subr.mxu0 %v377
        %v379 = vand.u32 %v348, 4294901760
        %380 = vmatpush1.msra.mxu0 %v379
        %381 = vmatprep.subr.mxu0 0.0
        %382 = vmatpush1.msra.mxu0 0.0
        %383 = vmatprep.subr.mxu0 0.0
        %384 = vmatpush1.msra.mxu0 0.0
        %385 = vmatprep.subr.mxu0 0.0
        %386 = vmatpush1.msra.mxu0 0.0
        %387 = vmatprep.subr.mxu0 0.0
        %388 = vmatpush1.msra.mxu0 0.0
        %389 = vmatprep.subr.mxu0 0.0
        %390 = vmatpush1.msra.mxu0 0.0
        %391 = vmatprep.subr.mxu0 0.0
        %392 = vmatpush1.msra.mxu0 0.0
        %393 = vmatprep.subr.mxu0 0.0
        %394 = vmatpush1.msra.mxu0 0.0
        %395 = vmatprep.subr.mxu0 0.0
        %396 = vmatpush1.msra.mxu0 0.0
        %397 = vmatprep.subr.mxu0 0.0
        %398 = vmatpush1.msra.mxu0 0.0
        %399 = vmatprep.subr.mxu0 0.0
        %400 = vmatpush1.msra.mxu0 0.0
        %401 = vmatprep.subr.mxu0 0.0
        %402 = vmatpush1.msra.mxu0 0.0
        %403 = vmatprep.subr.mxu0 0.0
        %404 = vmatpush1.msra.mxu0 0.0
        %405 = vmatprep.subr.mxu0 0.0
        %406 = vmatpush1.msra.mxu0 0.0
        %407 = vmatprep.subr.mxu0 0.0
        %408 = vmatpush1.msra.mxu0 0.0
        %409 = vmatprep.subr.mxu0 0.0
        %410 = vmatpush1.msra.mxu0 0.0
        %411 = vmatprep.subr.mxu0 0.0
        %412 = vmatpush1.msra.mxu0 0.0
        %413 = vmatprep.subr.mxu0 0.0
        %414 = vmatpush1.msra.mxu0 0.0
        %415 = vmatprep.subr.mxu0 0.0
        %416 = vmatpush1.msra.mxu0 0.0
        %417 = vmatprep.subr.mxu0 0.0
        %418 = vmatpush1.msra.mxu0 0.0
        %419 = vmatprep.subr.mxu0 0.0
        %420 = vmatpush1.msra.mxu0 0.0
        %421 = vmatprep.subr.mxu0 0.0
        %422 = vmatpush1.msra.mxu0 0.0
        %423 = vmatprep.subr.mxu0 0.0
        %424 = vmatpush1.msra.mxu0 0.0
        %425 = vmatprep.subr.mxu0 0.0
        %426 = vmatpush1.msra.mxu0 0.0
        %427 = vmatprep.subr.mxu0 0.0
        %428 = vmatpush1.msra.mxu0 0.0
        %429 = vmatprep.subr.mxu0 0.0
        %430 = vmatpush1.msra.mxu0 0.0
        %431 = vmatprep.subr.mxu0 0.0
        %432 = vmatpush1.msra.mxu0 0.0
        %433 = vmatprep.subr.mxu0 0.0
        %434 = vmatpush1.msra.mxu0 0.0
        %435 = vmatprep.subr.mxu0 0.0
        %436 = vmatpush1.msra.mxu0 0.0
        %437 = vmatprep.subr.mxu0 0.0
        %438 = vmatpush1.msra.mxu0 0.0
        %439 = vmatprep.subr.mxu0 0.0
        %440 = vmatpush1.msra.mxu0 0.0
        %441 = vmatprep.mubr.f32.mxu0 0.0
        %v442 = vand.u32 %v368, 4294901760
        %v443 = vsub.f32 %v368, %v442
        %v444 = vand.u32 %v443, 4294901760
        %v445 = vsub.f32 %v443, %v444
        %v446 = vand.u32 %v445, 4294901760
        %447 = vmatmul.mubr.f32.gmra.mrb[0].mxu0 %v446
        %v448 = vpop.f32.mrb[0].mxu0
        %v449 = vadd.f32 %v359, %v448
        %v450 = vpop.f32.mrb[0].mxu0
        %v451 = vadd.f32 %v359, %v450
        %452 = vmatprep.mubr.f32.mxu0 0.0
        %v453 = vand.u32 %v371, 4294901760
        %v454 = vsub.f32 %v371, %v453
        %v455 = vand.u32 %v454, 4294901760
        %v456 = vsub.f32 %v454, %v455
        %v457 = vand.u32 %v456, 4294901760
        %458 = vmatmul.mubr.f32.gmra.mrb[0].mxu0 %v457
        %v459 = vpop.f32.mrb[0].mxu0
        %v460 = vadd.f32 %v364, %v459
        %v461 = vpop.f32.mrb[0].mxu0
        %v462 = vadd.f32 %v364, %v461
        %463 = vdwg.mxu0
        %v464 = vand.u32 %v345, 4294901760
        %v465 = vsub.f32 %v345, %v464
        %v466 = vand.u32 %v465, 4294901760
        %v467 = vsub.f32 %v465, %v466
        %v468 = vand.u32 %v467, 4294901760
        %469 = vmatprep.subr.mxu0 %v468
        %v470 = vand.u32 %v344, 4294901760
        %v471 = vsub.f32 %v344, %v470
        %v472 = vand.u32 %v471, 4294901760
        %v473 = vsub.f32 %v471, %v472
        %v474 = vand.u32 %v473, 4294901760
        %475 = vmatpush1.msra.mxu0 %v474
        %v476 = vand.u32 %v349, 4294901760
        %v477 = vsub.f32 %v349, %v476
        %v478 = vand.u32 %v477, 4294901760
        %v479 = vsub.f32 %v477, %v478
        %v480 = vand.u32 %v479, 4294901760
        %481 = vmatprep.subr.mxu0 %v480
        %v482 = vand.u32 %v348, 4294901760
        %v483 = vsub.f32 %v348, %v482
        %v484 = vand.u32 %v483, 4294901760
        %v485 = vsub.f32 %v483, %v484
        %v486 = vand.u32 %v485, 4294901760
        %487 = vmatpush1.msra.mxu0 %v486
        %488 = vmatprep.subr.mxu0 0.0
        %489 = vmatpush1.msra.mxu0 0.0
        %490 = vmatprep.subr.mxu0 0.0
        %491 = vmatpush1.msra.mxu0 0.0
        %492 = vmatprep.subr.mxu0 0.0
        %493 = vmatpush1.msra.mxu0 0.0
        %494 = vmatprep.subr.mxu0 0.0
        %495 = vmatpush1.msra.mxu0 0.0
        %496 = vmatprep.subr.mxu0 0.0
        %497 = vmatpush1.msra.mxu0 0.0
        %498 = vmatprep.subr.mxu0 0.0
        %499 = vmatpush1.msra.mxu0 0.0
        %500 = vmatprep.subr.mxu0 0.0
        %501 = vmatpush1.msra.mxu0 0.0
        %502 = vmatprep.subr.mxu0 0.0
        %503 = vmatpush1.msra.mxu0 0.0
        %504 = vmatprep.subr.mxu0 0.0
        %505 = vmatpush1.msra.mxu0 0.0
        %506 = vmatprep.subr.mxu0 0.0
        %507 = vmatpush1.msra.mxu0 0.0
        %508 = vmatprep.subr.mxu0 0.0
        %509 = vmatpush1.msra.mxu0 0.0
        %510 = vmatprep.subr.mxu0 0.0
        %511 = vmatpush1.msra.mxu0 0.0
        %512 = vmatprep.subr.mxu0 0.0
        %513 = vmatpush1.msra.mxu0 0.0
        %514 = vmatprep.subr.mxu0 0.0
        %515 = vmatpush1.msra.mxu0 0.0
        %516 = vmatprep.subr.mxu0 0.0
        %517 = vmatpush1.msra.mxu0 0.0
        %518 = vmatprep.subr.mxu0 0.0
        %519 = vmatpush1.msra.mxu0 0.0
        %520 = vmatprep.subr.mxu0 0.0
        %521 = vmatpush1.msra.mxu0 0.0
        %522 = vmatprep.subr.mxu0 0.0
        %523 = vmatpush1.msra.mxu0 0.0
        %524 = vmatprep.subr.mxu0 0.0
        %525 = vmatpush1.msra.mxu0 0.0
        %526 = vmatprep.subr.mxu0 0.0
        %527 = vmatpush1.msra.mxu0 0.0
        %528 = vmatprep.subr.mxu0 0.0
        %529 = vmatpush1.msra.mxu0 0.0
        %530 = vmatprep.subr.mxu0 0.0
        %531 = vmatpush1.msra.mxu0 0.0
        %532 = vmatprep.subr.mxu0 0.0
        %533 = vmatpush1.msra.mxu0 0.0
        %534 = vmatprep.subr.mxu0 0.0
        %535 = vmatpush1.msra.mxu0 0.0
        %536 = vmatprep.subr.mxu0 0.0
        %537 = vmatpush1.msra.mxu0 0.0
        %538 = vmatprep.subr.mxu0 0.0
        %539 = vmatpush1.msra.mxu0 0.0
        %540 = vmatprep.subr.mxu0 0.0
        %541 = vmatpush1.msra.mxu0 0.0
        %542 = vmatprep.subr.mxu0 0.0
        %543 = vmatpush1.msra.mxu0 0.0
        %544 = vmatprep.subr.mxu0 0.0
        %545 = vmatpush1.msra.mxu0 0.0
        %546 = vmatprep.subr.mxu0 0.0
        %547 = vmatpush1.msra.mxu0 0.0
        %548 = vmatprep.mubr.f32.mxu0 0.0
        %v549 = vand.u32 %v368, 4294901760
        %550 = vmatmul.mubr.f32.gmra.mrb[0].mxu0 %v549
        %v551 = vpop.f32.mrb[0].mxu0
        %v552 = vadd.f32 %v449, %v551
        %v553 = vpop.f32.mrb[0].mxu0
        %v554 = vadd.f32 %v451, %v553
        %555 = vmatprep.mubr.f32.mxu0 0.0
        %v556 = vand.u32 %v371, 4294901760
        %557 = vmatmul.mubr.f32.gmra.mrb[0].mxu0 %v556
        %v558 = vpop.f32.mrb[0].mxu0
        %v559 = vadd.f32 %v460, %v558
        %v560 = vpop.f32.mrb[0].mxu0
        %v561 = vadd.f32 %v462, %v560
        %562 = vdwg.mxu0
        %v563 = vand.u32 %v345, 4294901760
        %v564 = vsub.f32 %v345, %v563
        %565 = vmatprep.subr.mxu0 %v564
        %v566 = vand.u32 %v344, 4294901760
        %v567 = vsub.f32 %v344, %v566
        %568 = vmatpush1.msra.mxu0 %v567
        %v569 = vand.u32 %v349, 4294901760
        %v570 = vsub.f32 %v349, %v569
        %571 = vmatprep.subr.mxu0 %v570
        %v572 = vand.u32 %v348, 4294901760
        %v573 = vsub.f32 %v348, %v572
        %574 = vmatpush1.msra.mxu0 %v573
        %575 = vmatprep.subr.mxu0 0.0
        %576 = vmatpush1.msra.mxu0 0.0
        %577 = vmatprep.subr.mxu0 0.0
        %578 = vmatpush1.msra.mxu0 0.0
        %579 = vmatprep.subr.mxu0 0.0
        %580 = vmatpush1.msra.mxu0 0.0
        %581 = vmatprep.subr.mxu0 0.0
        %582 = vmatpush1.msra.mxu0 0.0
        %583 = vmatprep.subr.mxu0 0.0
        %584 = vmatpush1.msra.mxu0 0.0
        %585 = vmatprep.subr.mxu0 0.0
        %586 = vmatpush1.msra.mxu0 0.0
        %587 = vmatprep.subr.mxu0 0.0
        %588 = vmatpush1.msra.mxu0 0.0
        %589 = vmatprep.subr.mxu0 0.0
        %590 = vmatpush1.msra.mxu0 0.0
        %591 = vmatprep.subr.mxu0 0.0
        %592 = vmatpush1.msra.mxu0 0.0
        %593 = vmatprep.subr.mxu0 0.0
        %594 = vmatpush1.msra.mxu0 0.0
        %595 = vmatprep.subr.mxu0 0.0
        %596 = vmatpush1.msra.mxu0 0.0
        %597 = vmatprep.subr.mxu0 0.0
        %598 = vmatpush1.msra.mxu0 0.0
        %599 = vmatprep.subr.mxu0 0.0
        %600 = vmatpush1.msra.mxu0 0.0
        %601 = vmatprep.subr.mxu0 0.0
        %602 = vmatpush1.msra.mxu0 0.0
        %603 = vmatprep.subr.mxu0 0.0
        %604 = vmatpush1.msra.mxu0 0.0
        %605 = vmatprep.subr.mxu0 0.0
        %606 = vmatpush1.msra.mxu0 0.0
        %607 = vmatprep.subr.mxu0 0.0
        %608 = vmatpush1.msra.mxu0 0.0
        %609 = vmatprep.subr.mxu0 0.0
        %610 = vmatpush1.msra.mxu0 0.0
        %611 = vmatprep.subr.mxu0 0.0
        %612 = vmatpush1.msra.mxu0 0.0
        %613 = vmatprep.subr.mxu0 0.0
        %614 = vmatpush1.msra.mxu0 0.0
        %615 = vmatprep.subr.mxu0 0.0
        %616 = vmatpush1.msra.mxu0 0.0
        %617 = vmatprep.subr.mxu0 0.0
        %618 = vmatpush1.msra.mxu0 0.0
        %619 = vmatprep.subr.mxu0 0.0
        %620 = vmatpush1.msra.mxu0 0.0
        %621 = vmatprep.subr.mxu0 0.0
        %622 = vmatpush1.msra.mxu0 0.0
        %623 = vmatprep.subr.mxu0 0.0
        %624 = vmatpush1.msra.mxu0 0.0
        %625 = vmatprep.subr.mxu0 0.0
        %626 = vmatpush1.msra.mxu0 0.0
        %627 = vmatprep.subr.mxu0 0.0
        %628 = vmatpush1.msra.mxu0 0.0
        %629 = vmatprep.subr.mxu0 0.0
        %630 = vmatpush1.msra.mxu0 0.0
        %631 = vmatprep.subr.mxu0 0.0
        %632 = vmatpush1.msra.mxu0 0.0
        %633 = vmatprep.subr.mxu0 0.0
        %634 = vmatpush1.msra.mxu0 0.0
        %635 = vmatprep.mubr.f32.mxu0 0.0
        %v636 = vand.u32 %v368, 4294901760
        %v637 = vsub.f32 %v368, %v636
        %638 = vmatmul.mubr.f32.gmra.mrb[0].mxu0 %v637
        %v639 = vpop.f32.mrb[0].mxu0
        %v640 = vadd.f32 %v552, %v639
        %v641 = vpop.f32.mrb[0].mxu0
        %v642 = vadd.f32 %v554, %v641
        %643 = vmatprep.mubr.f32.mxu0 0.0
        %v644 = vand.u32 %v371, 4294901760
        %v645 = vsub.f32 %v371, %v644
        %646 = vmatmul.mubr.f32.gmra.mrb[0].mxu0 %v645
        %v647 = vpop.f32.mrb[0].mxu0
        %v648 = vadd.f32 %v559, %v647
        %v649 = vpop.f32.mrb[0].mxu0
        %v650 = vadd.f32 %v561, %v649
        %651 = vdwg.mxu0
        %v652 = vand.u32 %v345, 4294901760
        %653 = vmatprep.subr.mxu0 %v652
        %v654 = vand.u32 %v344, 4294901760
        %655 = vmatpush1.msra.mxu0 %v654
        %v656 = vand.u32 %v349, 4294901760
        %657 = vmatprep.subr.mxu0 %v656
        %v658 = vand.u32 %v348, 4294901760
        %659 = vmatpush1.msra.mxu0 %v658
        %660 = vmatprep.subr.mxu0 0.0
        %661 = vmatpush1.msra.mxu0 0.0
        %662 = vmatprep.subr.mxu0 0.0
        %663 = vmatpush1.msra.mxu0 0.0
        %664 = vmatprep.subr.mxu0 0.0
        %665 = vmatpush1.msra.mxu0 0.0
        %666 = vmatprep.subr.mxu0 0.0
        %667 = vmatpush1.msra.mxu0 0.0
        %668 = vmatprep.subr.mxu0 0.0
        %669 = vmatpush1.msra.mxu0 0.0
        %670 = vmatprep.subr.mxu0 0.0
        %671 = vmatpush1.msra.mxu0 0.0
        %672 = vmatprep.subr.mxu0 0.0
        %673 = vmatpush1.msra.mxu0 0.0
        %674 = vmatprep.subr.mxu0 0.0
        %675 = vmatpush1.msra.mxu0 0.0
        %676 = vmatprep.subr.mxu0 0.0
        %677 = vmatpush1.msra.mxu0 0.0
        %678 = vmatprep.subr.mxu0 0.0
        %679 = vmatpush1.msra.mxu0 0.0
        %680 = vmatprep.subr.mxu0 0.0
        %681 = vmatpush1.msra.mxu0 0.0
        %682 = vmatprep.subr.mxu0 0.0
        %683 = vmatpush1.msra.mxu0 0.0
        %684 = vmatprep.subr.mxu0 0.0
        %685 = vmatpush1.msra.mxu0 0.0
        %686 = vmatprep.subr.mxu0 0.0
        %687 = vmatpush1.msra.mxu0 0.0
        %688 = vmatprep.subr.mxu0 0.0
        %689 = vmatpush1.msra.mxu0 0.0
        %690 = vmatprep.subr.mxu0 0.0
        %691 = vmatpush1.msra.mxu0 0.0
        %692 = vmatprep.subr.mxu0 0.0
        %693 = vmatpush1.msra.mxu0 0.0
        %694 = vmatprep.subr.mxu0 0.0
        %695 = vmatpush1.msra.mxu0 0.0
        %696 = vmatprep.subr.mxu0 0.0
        %697 = vmatpush1.msra.mxu0 0.0
        %698 = vmatprep.subr.mxu0 0.0
        %699 = vmatpush1.msra.mxu0 0.0
        %700 = vmatprep.subr.mxu0 0.0
        %701 = vmatpush1.msra.mxu0 0.0
        %702 = vmatprep.subr.mxu0 0.0
        %703 = vmatpush1.msra.mxu0 0.0
        %704 = vmatprep.subr.mxu0 0.0
        %705 = vmatpush1.msra.mxu0 0.0
        %706 = vmatprep.subr.mxu0 0.0
        %707 = vmatpush1.msra.mxu0 0.0
        %708 = vmatprep.subr.mxu0 0.0
        %709 = vmatpush1.msra.mxu0 0.0
        %710 = vmatprep.subr.mxu0 0.0
        %711 = vmatpush1.msra.mxu0 0.0
        %712 = vmatprep.subr.mxu0 0.0
        %713 = vmatpush1.msra.mxu0 0.0
        %714 = vmatprep.subr.mxu0 0.0
        %715 = vmatpush1.msra.mxu0 0.0
        %716 = vmatprep.subr.mxu0 0.0
        %717 = vmatpush1.msra.mxu0 0.0
        %718 = vmatprep.subr.mxu0 0.0
        %719 = vmatpush1.msra.mxu0 0.0
        %720 = vmatprep.mubr.f32.mxu0 0.0
        %v721 = vand.u32 %v368, 4294901760
        %v722 = vsub.f32 %v368, %v721
        %v723 = vand.u32 %v722, 4294901760
        %724 = vmatmul.mubr.f32.gmra.mrb[0].mxu0 %v723
        %v725 = vpop.f32.mrb[0].mxu0
        %v726 = vadd.f32 %v640, %v725
        %v727 = vpop.f32.mrb[0].mxu0
        %v728 = vadd.f32 %v642, %v727
        %729 = vmatprep.mubr.f32.mxu0 0.0
        %v730 = vand.u32 %v371, 4294901760
        %v731 = vsub.f32 %v371, %v730
        %v732 = vand.u32 %v731, 4294901760
        %733 = vmatmul.mubr.f32.gmra.mrb[0].mxu0 %v732
        %v734 = vpop.f32.mrb[0].mxu0
        %v735 = vadd.f32 %v648, %v734
        %v736 = vpop.f32.mrb[0].mxu0
        %v737 = vadd.f32 %v650, %v736
        %738 = vdwg.mxu0
        %v739 = vand.u32 %v345, 4294901760
        %v740 = vsub.f32 %v345, %v739
        %v741 = vand.u32 %v740, 4294901760
        %742 = vmatprep.subr.mxu0 %v741
        %v743 = vand.u32 %v344, 4294901760
        %v744 = vsub.f32 %v344, %v743
        %v745 = vand.u32 %v744, 4294901760
        %746 = vmatpush1.msra.mxu0 %v745
        %v747 = vand.u32 %v349, 4294901760
        %v748 = vsub.f32 %v349, %v747
        %v749 = vand.u32 %v748, 4294901760
        %750 = vmatprep.subr.mxu0 %v749
        %v751 = vand.u32 %v348, 4294901760
        %v752 = vsub.f32 %v348, %v751
        %v753 = vand.u32 %v752, 4294901760
        %754 = vmatpush1.msra.mxu0 %v753
        %755 = vmatprep.subr.mxu0 0.0
        %756 = vmatpush1.msra.mxu0 0.0
        %757 = vmatprep.subr.mxu0 0.0
        %758 = vmatpush1.msra.mxu0 0.0
        %759 = vmatprep.subr.mxu0 0.0
        %760 = vmatpush1.msra.mxu0 0.0
        %761 = vmatprep.subr.mxu0 0.0
        %762 = vmatpush1.msra.mxu0 0.0
        %763 = vmatprep.subr.mxu0 0.0
        %764 = vmatpush1.msra.mxu0 0.0
        %765 = vmatprep.subr.mxu0 0.0
        %766 = vmatpush1.msra.mxu0 0.0
        %767 = vmatprep.subr.mxu0 0.0
        %768 = vmatpush1.msra.mxu0 0.0
        %769 = vmatprep.subr.mxu0 0.0
        %770 = vmatpush1.msra.mxu0 0.0
        %771 = vmatprep.subr.mxu0 0.0
        %772 = vmatpush1.msra.mxu0 0.0
        %773 = vmatprep.subr.mxu0 0.0
        %774 = vmatpush1.msra.mxu0 0.0
        %775 = vmatprep.subr.mxu0 0.0
        %776 = vmatpush1.msra.mxu0 0.0
        %777 = vmatprep.subr.mxu0 0.0
        %778 = vmatpush1.msra.mxu0 0.0
        %779 = vmatprep.subr.mxu0 0.0
        %780 = vmatpush1.msra.mxu0 0.0
        %781 = vmatprep.subr.mxu0 0.0
        %782 = vmatpush1.msra.mxu0 0.0
        %783 = vmatprep.subr.mxu0 0.0
        %784 = vmatpush1.msra.mxu0 0.0
        %785 = vmatprep.subr.mxu0 0.0
        %786 = vmatpush1.msra.mxu0 0.0
        %787 = vmatprep.subr.mxu0 0.0
        %788 = vmatpush1.msra.mxu0 0.0
        %789 = vmatprep.subr.mxu0 0.0
        %790 = vmatpush1.msra.mxu0 0.0
        %791 = vmatprep.subr.mxu0 0.0
        %792 = vmatpush1.msra.mxu0 0.0
        %793 = vmatprep.subr.mxu0 0.0
        %794 = vmatpush1.msra.mxu0 0.0
        %795 = vmatprep.subr.mxu0 0.0
        %796 = vmatpush1.msra.mxu0 0.0
        %797 = vmatprep.subr.mxu0 0.0
        %798 = vmatpush1.msra.mxu0 0.0
        %799 = vmatprep.subr.mxu0 0.0
        %800 = vmatpush1.msra.mxu0 0.0
        %801 = vmatprep.subr.mxu0 0.0
        %802 = vmatpush1.msra.mxu0 0.0
        %803 = vmatprep.subr.mxu0 0.0
        %804 = vmatpush1.msra.mxu0 0.0
        %805 = vmatprep.subr.mxu0 0.0
        %806 = vmatpush1.msra.mxu0 0.0
        %807 = vmatprep.subr.mxu0 0.0
        %808 = vmatpush1.msra.mxu0 0.0
        %809 = vmatprep.subr.mxu0 0.0
        %810 = vmatpush1.msra.mxu0 0.0
        %811 = vmatprep.subr.mxu0 0.0
        %812 = vmatpush1.msra.mxu0 0.0
        %813 = vmatprep.subr.mxu0 0.0
        %814 = vmatpush1.msra.mxu0 0.0
        %815 = vmatprep.mubr.f32.mxu0 0.0
        %v816 = vand.u32 %v368, 4294901760
        %817 = vmatmul.mubr.f32.gmra.mrb[0].mxu0 %v816
        %v818 = vpop.f32.mrb[0].mxu0
        %v819 = vadd.f32 %v726, %v818
        %v820 = vpop.f32.mrb[0].mxu0
        %v821 = vadd.f32 %v728, %v820
        %822 = vmatprep.mubr.f32.mxu0 0.0
        %v823 = vand.u32 %v371, 4294901760
        %824 = vmatmul.mubr.f32.gmra.mrb[0].mxu0 %v823
        %v825 = vpop.f32.mrb[0].mxu0
        %v826 = vadd.f32 %v735, %v825
        %v827 = vpop.f32.mrb[0].mxu0
        %v828 = vadd.f32 %v737, %v827
        %829 = vdwg.mxu0
        %v830 = vand.u32 %v345, 4294901760
        %831 = vmatprep.subr.mxu0 %v830
        %v832 = vand.u32 %v344, 4294901760
        %833 = vmatpush1.msra.mxu0 %v832
        %v834 = vand.u32 %v349, 4294901760
        %835 = vmatprep.subr.mxu0 %v834
        %v836 = vand.u32 %v348, 4294901760
        %837 = vmatpush1.msra.mxu0 %v836
        %838 = vmatprep.subr.mxu0 0.0
        %839 = vmatpush1.msra.mxu0 0.0
        %840 = vmatprep.subr.mxu0 0.0
        %841 = vmatpush1.msra.mxu0 0.0
        %842 = vmatprep.subr.mxu0 0.0
        %843 = vmatpush1.msra.mxu0 0.0
        %844 = vmatprep.subr.mxu0 0.0
        %845 = vmatpush1.msra.mxu0 0.0
        %846 = vmatprep.subr.mxu0 0.0
        %847 = vmatpush1.msra.mxu0 0.0
        %848 = vmatprep.subr.mxu0 0.0
        %849 = vmatpush1.msra.mxu0 0.0
        %850 = vmatprep.subr.mxu0 0.0
        %851 = vmatpush1.msra.mxu0 0.0
        %852 = vmatprep.subr.mxu0 0.0
        %853 = vmatpush1.msra.mxu0 0.0
        %854 = vmatprep.subr.mxu0 0.0
        %855 = vmatpush1.msra.mxu0 0.0
        %856 = vmatprep.subr.mxu0 0.0
        %857 = vmatpush1.msra.mxu0 0.0
        %858 = vmatprep.subr.mxu0 0.0
        %859 = vmatpush1.msra.mxu0 0.0
        %860 = vmatprep.subr.mxu0 0.0
        %861 = vmatpush1.msra.mxu0 0.0
        %862 = vmatprep.subr.mxu0 0.0
        %863 = vmatpush1.msra.mxu0 0.0
        %864 = vmatprep.subr.mxu0 0.0
        %865 = vmatpush1.msra.mxu0 0.0
        %866 = vmatprep.subr.mxu0 0.0
        %867 = vmatpush1.msra.mxu0 0.0
        %868 = vmatprep.subr.mxu0 0.0
        %869 = vmatpush1.msra.mxu0 0.0
        %870 = vmatprep.subr.mxu0 0.0
        %871 = vmatpush1.msra.mxu0 0.0
        %872 = vmatprep.subr.mxu0 0.0
        %873 = vmatpush1.msra.mxu0 0.0
        %874 = vmatprep.subr.mxu0 0.0
        %875 = vmatpush1.msra.mxu0 0.0
        %876 = vmatprep.subr.mxu0 0.0
        %877 = vmatpush1.msra.mxu0 0.0
        %878 = vmatprep.subr.mxu0 0.0
        %879 = vmatpush1.msra.mxu0 0.0
        %880 = vmatprep.subr.mxu0 0.0
        %881 = vmatpush1.msra.mxu0 0.0
        %882 = vmatprep.subr.mxu0 0.0
        %883 = vmatpush1.msra.mxu0 0.0
        %884 = vmatprep.subr.mxu0 0.0
        %885 = vmatpush1.msra.mxu0 0.0
        %886 = vmatprep.subr.mxu0 0.0
        %887 = vmatpush1.msra.mxu0 0.0
        %888 = vmatprep.subr.mxu0 0.0
        %889 = vmatpush1.msra.mxu0 0.0
        %890 = vmatprep.subr.mxu0 0.0
        %891 = vmatpush1.msra.mxu0 0.0
        %892 = vmatprep.subr.mxu0 0.0
        %893 = vmatpush1.msra.mxu0 0.0
        %894 = vmatprep.subr.mxu0 0.0
        %895 = vmatpush1.msra.mxu0 0.0
        %896 = vmatprep.subr.mxu0 0.0
        %897 = vmatpush1.msra.mxu0 0.0
        %898 = vmatprep.mubr.f32.mxu0 0.0
        %v899 = vand.u32 %v368, 4294901760
        %900 = vmatmul.mubr.f32.gmra.mrb[0].mxu0 %v899
        %v901 = vpop.f32.mrb[0].mxu0
        %v902 = vadd.f32 %v819, %v901
        %v903 = vpop.f32.mrb[0].mxu0
        %v904 = vadd.f32 %v821, %v903
        %905 = vmatprep.mubr.f32.mxu0 0.0
        %v906 = vand.u32 %v371, 4294901760
        %907 = vmatmul.mubr.f32.gmra.mrb[0].mxu0 %v906
        %v908 = vpop.f32.mrb[0].mxu0
        %v909 = vadd.f32 %v826, %v908
        %v910 = vpop.f32.mrb[0].mxu0
        %v911 = vadd.f32 %v828, %v910
        %912 = vdwg.mxu0
        %v913 = vand.u32 %v347, 4294901760
        %914 = vmatprep.subr.mxu0 %v913
        %v915 = vand.u32 %v346, 4294901760
        %916 = vmatpush1.msra.mxu0 %v915
        %v917 = vand.u32 %v351, 4294901760
        %918 = vmatprep.subr.mxu0 %v917
        %v919 = vand.u32 %v350, 4294901760
        %920 = vmatpush1.msra.mxu0 %v919
        %921 = vmatprep.subr.mxu0 0.0
        %922 = vmatpush1.msra.mxu0 0.0
        %923 = vmatprep.subr.mxu0 0.0
        %924 = vmatpush1.msra.mxu0 0.0
        %925 = vmatprep.subr.mxu0 0.0
        %926 = vmatpush1.msra.mxu0 0.0
        %927 = vmatprep.subr.mxu0 0.0
        %928 = vmatpush1.msra.mxu0 0.0
        %929 = vmatprep.subr.mxu0 0.0
        %930 = vmatpush1.msra.mxu0 0.0
        %931 = vmatprep.subr.mxu0 0.0
        %932 = vmatpush1.msra.mxu0 0.0
        %933 = vmatprep.subr.mxu0 0.0
        %934 = vmatpush1.msra.mxu0 0.0
        %935 = vmatprep.subr.mxu0 0.0
        %936 = vmatpush1.msra.mxu0 0.0
        %937 = vmatprep.subr.mxu0 0.0
        %938 = vmatpush1.msra.mxu0 0.0
        %939 = vmatprep.subr.mxu0 0.0
        %940 = vmatpush1.msra.mxu0 0.0
        %941 = vmatprep.subr.mxu0 0.0
        %942 = vmatpush1.msra.mxu0 0.0
        %943 = vmatprep.subr.mxu0 0.0
        %944 = vmatpush1.msra.mxu0 0.0
        %945 = vmatprep.subr.mxu0 0.0
        %946 = vmatpush1.msra.mxu0 0.0
        %947 = vmatprep.subr.mxu0 0.0
        %948 = vmatpush1.msra.mxu0 0.0
        %949 = vmatprep.subr.mxu0 0.0
        %950 = vmatpush1.msra.mxu0 0.0
        %951 = vmatprep.subr.mxu0 0.0
        %952 = vmatpush1.msra.mxu0 0.0
        %953 = vmatprep.subr.mxu0 0.0
        %954 = vmatpush1.msra.mxu0 0.0
        %955 = vmatprep.subr.mxu0 0.0
        %956 = vmatpush1.msra.mxu0 0.0
        %957 = vmatprep.subr.mxu0 0.0
        %958 = vmatpush1.msra.mxu0 0.0
        %959 = vmatprep.subr.mxu0 0.0
        %960 = vmatpush1.msra.mxu0 0.0
        %961 = vmatprep.subr.mxu0 0.0
        %962 = vmatpush1.msra.mxu0 0.0
        %963 = vmatprep.subr.mxu0 0.0
        %964 = vmatpush1.msra.mxu0 0.0
        %965 = vmatprep.subr.mxu0 0.0
        %966 = vmatpush1.msra.mxu0 0.0
        %967 = vmatprep.subr.mxu0 0.0
        %968 = vmatpush1.msra.mxu0 0.0
        %969 = vmatprep.subr.mxu0 0.0
        %970 = vmatpush1.msra.mxu0 0.0
        %971 = vmatprep.subr.mxu0 0.0
        %972 = vmatpush1.msra.mxu0 0.0
        %973 = vmatprep.subr.mxu0 0.0
        %974 = vmatpush1.msra.mxu0 0.0
        %975 = vmatprep.subr.mxu0 0.0
        %976 = vmatpush1.msra.mxu0 0.0
        %977 = vmatprep.subr.mxu0 0.0
        %978 = vmatpush1.msra.mxu0 0.0
        %979 = vmatprep.subr.mxu0 0.0
        %980 = vmatpush1.msra.mxu0 0.0
        %981 = vmatprep.mubr.f32.mxu0 0.0
        %v982 = vand.u32 %v368, 4294901760
        %v983 = vsub.f32 %v368, %v982
        %v984 = vand.u32 %v983, 4294901760
        %v985 = vsub.f32 %v983, %v984
        %v986 = vand.u32 %v985, 4294901760
        %987 = vmatmul.mubr.f32.gmra.mrb[0].mxu0 %v986
        %v988 = vpop.f32.mrb[0].mxu0
        %v989 = vadd.f32 %v359, %v988
        %v990 = vpop.f32.mrb[0].mxu0
        %v991 = vadd.f32 %v359, %v990
        %992 = vmatprep.mubr.f32.mxu0 0.0
        %v993 = vand.u32 %v371, 4294901760
        %v994 = vsub.f32 %v371, %v993
        %v995 = vand.u32 %v994, 4294901760
        %v996 = vsub.f32 %v994, %v995
        %v997 = vand.u32 %v996, 4294901760
        %998 = vmatmul.mubr.f32.gmra.mrb[0].mxu0 %v997
        %v999 = vpop.f32.mrb[0].mxu0
        %v1000 = vadd.f32 %v364, %v999
        %v1001 = vpop.f32.mrb[0].mxu0
        %v1002 = vadd.f32 %v364, %v1001
        %1003 = vdwg.mxu0
        %v1004 = vand.u32 %v347, 4294901760
        %v1005 = vsub.f32 %v347, %v1004
        %v1006 = vand.u32 %v1005, 4294901760
        %v1007 = vsub.f32 %v1005, %v1006
        %v1008 = vand.u32 %v1007, 4294901760
        %1009 = vmatprep.subr.mxu0 %v1008
        %v1010 = vand.u32 %v346, 4294901760
        %v1011 = vsub.f32 %v346, %v1010
        %v1012 = vand.u32 %v1011, 4294901760
        %v1013 = vsub.f32 %v1011, %v1012
        %v1014 = vand.u32 %v1013, 4294901760
        %1015 = vmatpush1.msra.mxu0 %v1014
        %v1016 = vand.u32 %v351, 4294901760
        %v1017 = vsub.f32 %v351, %v1016
        %v1018 = vand.u32 %v1017, 4294901760
        %v1019 = vsub.f32 %v1017, %v1018
        %v1020 = vand.u32 %v1019, 4294901760
        %1021 = vmatprep.subr.mxu0 %v1020
        %v1022 = vand.u32 %v350, 4294901760
        %v1023 = vsub.f32 %v350, %v1022
        %v1024 = vand.u32 %v1023, 4294901760
        %v1025 = vsub.f32 %v1023, %v1024
        %v1026 = vand.u32 %v1025, 4294901760
        %1027 = vmatpush1.msra.mxu0 %v1026
        %1028 = vmatprep.subr.mxu0 0.0
        %1029 = vmatpush1.msra.mxu0 0.0
        %1030 = vmatprep.subr.mxu0 0.0
        %1031 = vmatpush1.msra.mxu0 0.0
        %1032 = vmatprep.subr.mxu0 0.0
        %1033 = vmatpush1.msra.mxu0 0.0
        %1034 = vmatprep.subr.mxu0 0.0
        %1035 = vmatpush1.msra.mxu0 0.0
        %1036 = vmatprep.subr.mxu0 0.0
        %1037 = vmatpush1.msra.mxu0 0.0
        %1038 = vmatprep.subr.mxu0 0.0
        %1039 = vmatpush1.msra.mxu0 0.0
        %1040 = vmatprep.subr.mxu0 0.0
        %1041 = vmatpush1.msra.mxu0 0.0
        %1042 = vmatprep.subr.mxu0 0.0
        %1043 = vmatpush1.msra.mxu0 0.0
        %1044 = vmatprep.subr.mxu0 0.0
        %1045 = vmatpush1.msra.mxu0 0.0
        %1046 = vmatprep.subr.mxu0 0.0
        %1047 = vmatpush1.msra.mxu0 0.0
        %1048 = vmatprep.subr.mxu0 0.0
        %1049 = vmatpush1.msra.mxu0 0.0
        %1050 = vmatprep.subr.mxu0 0.0
        %1051 = vmatpush1.msra.mxu0 0.0
        %1052 = vmatprep.subr.mxu0 0.0
        %1053 = vmatpush1.msra.mxu0 0.0
        %1054 = vmatprep.subr.mxu0 0.0
        %1055 = vmatpush1.msra.mxu0 0.0
        %1056 = vmatprep.subr.mxu0 0.0
        %1057 = vmatpush1.msra.mxu0 0.0
        %1058 = vmatprep.subr.mxu0 0.0
        %1059 = vmatpush1.msra.mxu0 0.0
        %1060 = vmatprep.subr.mxu0 0.0
        %1061 = vmatpush1.msra.mxu0 0.0
        %1062 = vmatprep.subr.mxu0 0.0
        %1063 = vmatpush1.msra.mxu0 0.0
        %1064 = vmatprep.subr.mxu0 0.0
        %1065 = vmatpush1.msra.mxu0 0.0
        %1066 = vmatprep.subr.mxu0 0.0
        %1067 = vmatpush1.msra.mxu0 0.0
        %1068 = vmatprep.subr.mxu0 0.0
        %1069 = vmatpush1.msra.mxu0 0.0
        %1070 = vmatprep.subr.mxu0 0.0
        %1071 = vmatpush1.msra.mxu0 0.0
        %1072 = vmatprep.subr.mxu0 0.0
        %1073 = vmatpush1.msra.mxu0 0.0
        %1074 = vmatprep.subr.mxu0 0.0
        %1075 = vmatpush1.msra.mxu0 0.0
        %1076 = vmatprep.subr.mxu0 0.0
        %1077 = vmatpush1.msra.mxu0 0.0
        %1078 = vmatprep.subr.mxu0 0.0
        %1079 = vmatpush1.msra.mxu0 0.0
        %1080 = vmatprep.subr.mxu0 0.0
        %1081 = vmatpush1.msra.mxu0 0.0
        %1082 = vmatprep.subr.mxu0 0.0
        %1083 = vmatpush1.msra.mxu0 0.0
        %1084 = vmatprep.subr.mxu0 0.0
        %1085 = vmatpush1.msra.mxu0 0.0
        %1086 = vmatprep.subr.mxu0 0.0
        %1087 = vmatpush1.msra.mxu0 0.0
        %1088 = vmatprep.mubr.f32.mxu0 0.0
        %v1089 = vand.u32 %v368, 4294901760
        %1090 = vmatmul.mubr.f32.gmra.mrb[0].mxu0 %v1089
        %v1091 = vpop.f32.mrb[0].mxu0
        %v1092 = vadd.f32 %v989, %v1091
        %v1093 = vpop.f32.mrb[0].mxu0
        %v1094 = vadd.f32 %v991, %v1093
        %1095 = vmatprep.mubr.f32.mxu0 0.0
        %v1096 = vand.u32 %v371, 4294901760
        %1097 = vmatmul.mubr.f32.gmra.mrb[0].mxu0 %v1096
        %v1098 = vpop.f32.mrb[0].mxu0
        %v1099 = vadd.f32 %v1000, %v1098
        %v1100 = vpop.f32.mrb[0].mxu0
        %v1101 = vadd.f32 %v1002, %v1100
        %1102 = vdwg.mxu0
        %v1103 = vand.u32 %v347, 4294901760
        %v1104 = vsub.f32 %v347, %v1103
        %1105 = vmatprep.subr.mxu0 %v1104
        %v1106 = vand.u32 %v346, 4294901760
        %v1107 = vsub.f32 %v346, %v1106
        %1108 = vmatpush1.msra.mxu0 %v1107
        %v1109 = vand.u32 %v351, 4294901760
        %v1110 = vsub.f32 %v351, %v1109
        %1111 = vmatprep.subr.mxu0 %v1110
        %v1112 = vand.u32 %v350, 4294901760
        %v1113 = vsub.f32 %v350, %v1112
        %1114 = vmatpush1.msra.mxu0 %v1113
        %1115 = vmatprep.subr.mxu0 0.0
        %1116 = vmatpush1.msra.mxu0 0.0
        %1117 = vmatprep.subr.mxu0 0.0
        %1118 = vmatpush1.msra.mxu0 0.0
        %1119 = vmatprep.subr.mxu0 0.0
        %1120 = vmatpush1.msra.mxu0 0.0
        %1121 = vmatprep.subr.mxu0 0.0
        %1122 = vmatpush1.msra.mxu0 0.0
        %1123 = vmatprep.subr.mxu0 0.0
        %1124 = vmatpush1.msra.mxu0 0.0
        %1125 = vmatprep.subr.mxu0 0.0
        %1126 = vmatpush1.msra.mxu0 0.0
        %1127 = vmatprep.subr.mxu0 0.0
        %1128 = vmatpush1.msra.mxu0 0.0
        %1129 = vmatprep.subr.mxu0 0.0
        %1130 = vmatpush1.msra.mxu0 0.0
        %1131 = vmatprep.subr.mxu0 0.0
        %1132 = vmatpush1.msra.mxu0 0.0
        %1133 = vmatprep.subr.mxu0 0.0
        %1134 = vmatpush1.msra.mxu0 0.0
        %1135 = vmatprep.subr.mxu0 0.0
        %1136 = vmatpush1.msra.mxu0 0.0
        %1137 = vmatprep.subr.mxu0 0.0
        %1138 = vmatpush1.msra.mxu0 0.0
        %1139 = vmatprep.subr.mxu0 0.0
        %1140 = vmatpush1.msra.mxu0 0.0
        %1141 = vmatprep.subr.mxu0 0.0
        %1142 = vmatpush1.msra.mxu0 0.0
        %1143 = vmatprep.subr.mxu0 0.0
        %1144 = vmatpush1.msra.mxu0 0.0
        %1145 = vmatprep.subr.mxu0 0.0
        %1146 = vmatpush1.msra.mxu0 0.0
        %1147 = vmatprep.subr.mxu0 0.0
        %1148 = vmatpush1.msra.mxu0 0.0
        %1149 = vmatprep.subr.mxu0 0.0
        %1150 = vmatpush1.msra.mxu0 0.0
        %1151 = vmatprep.subr.mxu0 0.0
        %1152 = vmatpush1.msra.mxu0 0.0
        %1153 = vmatprep.subr.mxu0 0.0
        %1154 = vmatpush1.msra.mxu0 0.0
        %1155 = vmatprep.subr.mxu0 0.0
        %1156 = vmatpush1.msra.mxu0 0.0
        %1157 = vmatprep.subr.mxu0 0.0
        %1158 = vmatpush1.msra.mxu0 0.0
        %1159 = vmatprep.subr.mxu0 0.0
        %1160 = vmatpush1.msra.mxu0 0.0
        %1161 = vmatprep.subr.mxu0 0.0
        %1162 = vmatpush1.msra.mxu0 0.0
        %1163 = vmatprep.subr.mxu0 0.0
        %1164 = vmatpush1.msra.mxu0 0.0
        %1165 = vmatprep.subr.mxu0 0.0
        %1166 = vmatpush1.msra.mxu0 0.0
        %1167 = vmatprep.subr.mxu0 0.0
        %1168 = vmatpush1.msra.mxu0 0.0
        %1169 = vmatprep.subr.mxu0 0.0
        %1170 = vmatpush1.msra.mxu0 0.0
        %1171 = vmatprep.subr.mxu0 0.0
        %1172 = vmatpush1.msra.mxu0 0.0
        %1173 = vmatprep.subr.mxu0 0.0
        %1174 = vmatpush1.msra.mxu0 0.0
        %1175 = vmatprep.mubr.f32.mxu0 0.0
        %v1176 = vand.u32 %v368, 4294901760
        %v1177 = vsub.f32 %v368, %v1176
        %1178 = vmatmul.mubr.f32.gmra.mrb[0].mxu0 %v1177
        %v1179 = vpop.f32.mrb[0].mxu0
        %v1180 = vadd.f32 %v1092, %v1179
        %v1181 = vpop.f32.mrb[0].mxu0
        %v1182 = vadd.f32 %v1094, %v1181
        %1183 = vmatprep.mubr.f32.mxu0 0.0
        %v1184 = vand.u32 %v371, 4294901760
        %v1185 = vsub.f32 %v371, %v1184
        %1186 = vmatmul.mubr.f32.gmra.mrb[0].mxu0 %v1185
        %v1187 = vpop.f32.mrb[0].mxu0
        %v1188 = vadd.f32 %v1099, %v1187
        %v1189 = vpop.f32.mrb[0].mxu0
        %v1190 = vadd.f32 %v1101, %v1189
        %1191 = vdwg.mxu0
        %v1192 = vand.u32 %v347, 4294901760
        %1193 = vmatprep.subr.mxu0 %v1192
        %v1194 = vand.u32 %v346, 4294901760
        %1195 = vmatpush1.msra.mxu0 %v1194
        %v1196 = vand.u32 %v351, 4294901760
        %1197 = vmatprep.subr.mxu0 %v1196
        %v1198 = vand.u32 %v350, 4294901760
        %1199 = vmatpush1.msra.mxu0 %v1198
        %1200 = vmatprep.subr.mxu0 0.0
        %1201 = vmatpush1.msra.mxu0 0.0
        %1202 = vmatprep.subr.mxu0 0.0
        %1203 = vmatpush1.msra.mxu0 0.0
        %1204 = vmatprep.subr.mxu0 0.0
        %1205 = vmatpush1.msra.mxu0 0.0
        %1206 = vmatprep.subr.mxu0 0.0
        %1207 = vmatpush1.msra.mxu0 0.0
        %1208 = vmatprep.subr.mxu0 0.0
        %1209 = vmatpush1.msra.mxu0 0.0
        %1210 = vmatprep.subr.mxu0 0.0
        %1211 = vmatpush1.msra.mxu0 0.0
        %1212 = vmatprep.subr.mxu0 0.0
        %1213 = vmatpush1.msra.mxu0 0.0
        %1214 = vmatprep.subr.mxu0 0.0
        %1215 = vmatpush1.msra.mxu0 0.0
        %1216 = vmatprep.subr.mxu0 0.0
        %1217 = vmatpush1.msra.mxu0 0.0
        %1218 = vmatprep.subr.mxu0 0.0
        %1219 = vmatpush1.msra.mxu0 0.0
        %1220 = vmatprep.subr.mxu0 0.0
        %1221 = vmatpush1.msra.mxu0 0.0
        %1222 = vmatprep.subr.mxu0 0.0
        %1223 = vmatpush1.msra.mxu0 0.0
        %1224 = vmatprep.subr.mxu0 0.0
        %1225 = vmatpush1.msra.mxu0 0.0
        %1226 = vmatprep.subr.mxu0 0.0
        %1227 = vmatpush1.msra.mxu0 0.0
        %1228 = vmatprep.subr.mxu0 0.0
        %1229 = vmatpush1.msra.mxu0 0.0
        %1230 = vmatprep.subr.mxu0 0.0
        %1231 = vmatpush1.msra.mxu0 0.0
        %1232 = vmatprep.subr.mxu0 0.0
        %1233 = vmatpush1.msra.mxu0 0.0
        %1234 = vmatprep.subr.mxu0 0.0
        %1235 = vmatpush1.msra.mxu0 0.0
        %1236 = vmatprep.subr.mxu0 0.0
        %1237 = vmatpush1.msra.mxu0 0.0
        %1238 = vmatprep.subr.mxu0 0.0
        %1239 = vmatpush1.msra.mxu0 0.0
        %1240 = vmatprep.subr.mxu0 0.0
        %1241 = vmatpush1.msra.mxu0 0.0
        %1242 = vmatprep.subr.mxu0 0.0
        %1243 = vmatpush1.msra.mxu0 0.0
        %1244 = vmatprep.subr.mxu0 0.0
        %1245 = vmatpush1.msra.mxu0 0.0
        %1246 = vmatprep.subr.mxu0 0.0
        %1247 = vmatpush1.msra.mxu0 0.0
        %1248 = vmatprep.subr.mxu0 0.0
        %1249 = vmatpush1.msra.mxu0 0.0
        %1250 = vmatprep.subr.mxu0 0.0
        %1251 = vmatpush1.msra.mxu0 0.0
        %1252 = vmatprep.subr.mxu0 0.0
        %1253 = vmatpush1.msra.mxu0 0.0
        %1254 = vmatprep.subr.mxu0 0.0
        %1255 = vmatpush1.msra.mxu0 0.0
        %1256 = vmatprep.subr.mxu0 0.0
        %1257 = vmatpush1.msra.mxu0 0.0
        %1258 = vmatprep.subr.mxu0 0.0
        %1259 = vmatpush1.msra.mxu0 0.0
        %1260 = vmatprep.mubr.f32.mxu0 0.0
        %v1261 = vand.u32 %v368, 4294901760
        %v1262 = vsub.f32 %v368, %v1261
        %v1263 = vand.u32 %v1262, 4294901760
        %1264 = vmatmul.mubr.f32.gmra.mrb[0].mxu0 %v1263
        %v1265 = vpop.f32.mrb[0].mxu0
        %v1266 = vadd.f32 %v1180, %v1265
        %v1267 = vpop.f32.mrb[0].mxu0
        %v1268 = vadd.f32 %v1182, %v1267
        %1269 = vmatprep.mubr.f32.mxu0 0.0
        %v1270 = vand.u32 %v371, 4294901760
        %v1271 = vsub.f32 %v371, %v1270
        %v1272 = vand.u32 %v1271, 4294901760
        %1273 = vmatmul.mubr.f32.gmra.mrb[0].mxu0 %v1272
        %v1274 = vpop.f32.mrb[0].mxu0
        %v1275 = vadd.f32 %v1188, %v1274
        %v1276 = vpop.f32.mrb[0].mxu0
        %v1277 = vadd.f32 %v1190, %v1276
        %1278 = vdwg.mxu0
        %v1279 = vand.u32 %v347, 4294901760
        %v1280 = vsub.f32 %v347, %v1279
        %v1281 = vand.u32 %v1280, 4294901760
        %1282 = vmatprep.subr.mxu0 %v1281
        %v1283 = vand.u32 %v346, 4294901760
        %v1284 = vsub.f32 %v346, %v1283
        %v1285 = vand.u32 %v1284, 4294901760
        %1286 = vmatpush1.msra.mxu0 %v1285
        %v1287 = vand.u32 %v351, 4294901760
        %v1288 = vsub.f32 %v351, %v1287
        %v1289 = vand.u32 %v1288, 4294901760
        %1290 = vmatprep.subr.mxu0 %v1289
        %v1291 = vand.u32 %v350, 4294901760
        %v1292 = vsub.f32 %v350, %v1291
        %v1293 = vand.u32 %v1292, 4294901760
        %1294 = vmatpush1.msra.mxu0 %v1293
        %1295 = vmatprep.subr.mxu0 0.0
        %1296 = vmatpush1.msra.mxu0 0.0
        %1297 = vmatprep.subr.mxu0 0.0
        %1298 = vmatpush1.msra.mxu0 0.0
        %1299 = vmatprep.subr.mxu0 0.0
        %1300 = vmatpush1.msra.mxu0 0.0
        %1301 = vmatprep.subr.mxu0 0.0
        %1302 = vmatpush1.msra.mxu0 0.0
        %1303 = vmatprep.subr.mxu0 0.0
        %1304 = vmatpush1.msra.mxu0 0.0
        %1305 = vmatprep.subr.mxu0 0.0
        %1306 = vmatpush1.msra.mxu0 0.0
        %1307 = vmatprep.subr.mxu0 0.0
        %1308 = vmatpush1.msra.mxu0 0.0
        %1309 = vmatprep.subr.mxu0 0.0
        %1310 = vmatpush1.msra.mxu0 0.0
        %1311 = vmatprep.subr.mxu0 0.0
        %1312 = vmatpush1.msra.mxu0 0.0
        %1313 = vmatprep.subr.mxu0 0.0
        %1314 = vmatpush1.msra.mxu0 0.0
        %1315 = vmatprep.subr.mxu0 0.0
        %1316 = vmatpush1.msra.mxu0 0.0
        %1317 = vmatprep.subr.mxu0 0.0
        %1318 = vmatpush1.msra.mxu0 0.0
        %1319 = vmatprep.subr.mxu0 0.0
        %1320 = vmatpush1.msra.mxu0 0.0
        %1321 = vmatprep.subr.mxu0 0.0
        %1322 = vmatpush1.msra.mxu0 0.0
        %1323 = vmatprep.subr.mxu0 0.0
        %1324 = vmatpush1.msra.mxu0 0.0
        %1325 = vmatprep.subr.mxu0 0.0
        %1326 = vmatpush1.msra.mxu0 0.0
        %1327 = vmatprep.subr.mxu0 0.0
        %1328 = vmatpush1.msra.mxu0 0.0
        %1329 = vmatprep.subr.mxu0 0.0
        %1330 = vmatpush1.msra.mxu0 0.0
        %1331 = vmatprep.subr.mxu0 0.0
        %1332 = vmatpush1.msra.mxu0 0.0
        %1333 = vmatprep.subr.mxu0 0.0
        %1334 = vmatpush1.msra.mxu0 0.0
        %1335 = vmatprep.subr.mxu0 0.0
        %1336 = vmatpush1.msra.mxu0 0.0
        %1337 = vmatprep.subr.mxu0 0.0
        %1338 = vmatpush1.msra.mxu0 0.0
        %1339 = vmatprep.subr.mxu0 0.0
        %1340 = vmatpush1.msra.mxu0 0.0
        %1341 = vmatprep.subr.mxu0 0.0
        %1342 = vmatpush1.msra.mxu0 0.0
        %1343 = vmatprep.subr.mxu0 0.0
        %1344 = vmatpush1.msra.mxu0 0.0
        %1345 = vmatprep.subr.mxu0 0.0
        %1346 = vmatpush1.msra.mxu0 0.0
        %1347 = vmatprep.subr.mxu0 0.0
        %1348 = vmatpush1.msra.mxu0 0.0
        %1349 = vmatprep.subr.mxu0 0.0
        %1350 = vmatpush1.msra.mxu0 0.0
        %1351 = vmatprep.subr.mxu0 0.0
        %1352 = vmatpush1.msra.mxu0 0.0
        %1353 = vmatprep.subr.mxu0 0.0
        %1354 = vmatpush1.msra.mxu0 0.0
        %1355 = vmatprep.mubr.f32.mxu0 0.0
        %v1356 = vand.u32 %v368, 4294901760
        %1357 = vmatmul.mubr.f32.gmra.mrb[0].mxu0 %v1356
        %v1358 = vpop.f32.mrb[0].mxu0
        %v1359 = vadd.f32 %v1266, %v1358
        %v1360 = vpop.f32.mrb[0].mxu0
        %v1361 = vadd.f32 %v1268, %v1360
        %1362 = vmatprep.mubr.f32.mxu0 0.0
        %v1363 = vand.u32 %v371, 4294901760
        %1364 = vmatmul.mubr.f32.gmra.mrb[0].mxu0 %v1363
        %v1365 = vpop.f32.mrb[0].mxu0
        %v1366 = vadd.f32 %v1275, %v1365
        %v1367 = vpop.f32.mrb[0].mxu0
        %v1368 = vadd.f32 %v1277, %v1367
        %1369 = vdwg.mxu0
        %v1370 = vand.u32 %v347, 4294901760
        %1371 = vmatprep.subr.mxu0 %v1370
        %v1372 = vand.u32 %v346, 4294901760
        %1373 = vmatpush1.msra.mxu0 %v1372
        %v1374 = vand.u32 %v351, 4294901760
        %1375 = vmatprep.subr.mxu0 %v1374
        %v1376 = vand.u32 %v350, 4294901760
        %1377 = vmatpush1.msra.mxu0 %v1376
        %1378 = vmatprep.subr.mxu0 0.0
        %1379 = vmatpush1.msra.mxu0 0.0
        %1380 = vmatprep.subr.mxu0 0.0
        %1381 = vmatpush1.msra.mxu0 0.0
        %1382 = vmatprep.subr.mxu0 0.0
        %1383 = vmatpush1.msra.mxu0 0.0
        %1384 = vmatprep.subr.mxu0 0.0
        %1385 = vmatpush1.msra.mxu0 0.0
        %1386 = vmatprep.subr.mxu0 0.0
        %1387 = vmatpush1.msra.mxu0 0.0
        %1388 = vmatprep.subr.mxu0 0.0
        %1389 = vmatpush1.msra.mxu0 0.0
        %1390 = vmatprep.subr.mxu0 0.0
        %1391 = vmatpush1.msra.mxu0 0.0
        %1392 = vmatprep.subr.mxu0 0.0
        %1393 = vmatpush1.msra.mxu0 0.0
        %1394 = vmatprep.subr.mxu0 0.0
        %1395 = vmatpush1.msra.mxu0 0.0
        %1396 = vmatprep.subr.mxu0 0.0
        %1397 = vmatpush1.msra.mxu0 0.0
        %1398 = vmatprep.subr.mxu0 0.0
        %1399 = vmatpush1.msra.mxu0 0.0
        %1400 = vmatprep.subr.mxu0 0.0
        %1401 = vmatpush1.msra.mxu0 0.0
        %1402 = vmatprep.subr.mxu0 0.0
        %1403 = vmatpush1.msra.mxu0 0.0
        %1404 = vmatprep.subr.mxu0 0.0
        %1405 = vmatpush1.msra.mxu0 0.0
        %1406 = vmatprep.subr.mxu0 0.0
        %1407 = vmatpush1.msra.mxu0 0.0
        %1408 = vmatprep.subr.mxu0 0.0
        %1409 = vmatpush1.msra.mxu0 0.0
        %1410 = vmatprep.subr.mxu0 0.0
        %1411 = vmatpush1.msra.mxu0 0.0
        %1412 = vmatprep.subr.mxu0 0.0
        %1413 = vmatpush1.msra.mxu0 0.0
        %1414 = vmatprep.subr.mxu0 0.0
        %1415 = vmatpush1.msra.mxu0 0.0
        %1416 = vmatprep.subr.mxu0 0.0
        %1417 = vmatpush1.msra.mxu0 0.0
        %1418 = vmatprep.subr.mxu0 0.0
        %1419 = vmatpush1.msra.mxu0 0.0
        %1420 = vmatprep.subr.mxu0 0.0
        %1421 = vmatpush1.msra.mxu0 0.0
        %1422 = vmatprep.subr.mxu0 0.0
        %1423 = vmatpush1.msra.mxu0 0.0
        %1424 = vmatprep.subr.mxu0 0.0
        %1425 = vmatpush1.msra.mxu0 0.0
        %1426 = vmatprep.subr.mxu0 0.0
        %1427 = vmatpush1.msra.mxu0 0.0
        %1428 = vmatprep.subr.mxu0 0.0
        %1429 = vmatpush1.msra.mxu0 0.0
        %1430 = vmatprep.subr.mxu0 0.0
        %1431 = vmatpush1.msra.mxu0 0.0
        %1432 = vmatprep.subr.mxu0 0.0
        %1433 = vmatpush1.msra.mxu0 0.0
        %1434 = vmatprep.subr.mxu0 0.0
        %1435 = vmatpush1.msra.mxu0 0.0
        %1436 = vmatprep.subr.mxu0 0.0
        %1437 = vmatpush1.msra.mxu0 0.0
        %1438 = vmatprep.mubr.f32.mxu0 0.0
        %v1439 = vand.u32 %v368, 4294901760
        %1440 = vmatmul.mubr.f32.gmra.mrb[0].mxu0 %v1439
        %v1441 = vpop.f32.mrb[0].mxu0
        %v1442 = vadd.f32 %v1359, %v1441
        %v1443 = vpop.f32.mrb[0].mxu0
        %v1444 = vadd.f32 %v1361, %v1443
        %1445 = vmatprep.mubr.f32.mxu0 0.0
        %v1446 = vand.u32 %v371, 4294901760
        %1447 = vmatmul.mubr.f32.gmra.mrb[0].mxu0 %v1446
        %v1448 = vpop.f32.mrb[0].mxu0
        %v1449 = vadd.f32 %v1366, %v1448
        %v1450 = vpop.f32.mrb[0].mxu0
        %v1451 = vadd.f32 %v1368, %v1450
        %1452 = vdwg.mxu0
        %v1453 = vmax.f32 %v902, 0.0
        %v1454 = vmax.f32 %v904, 0.0
        %v1455 = vmax.f32 %v1442, 0.0
        %v1456 = vmax.f32 %v1444, 0.0
        %v1457 = vmax.f32 %v909, 0.0
        %v1458 = vmax.f32 %v911, 0.0
        %v1459 = vmax.f32 %v1449, 0.0
        %v1460 = vmax.f32 %v1451, 0.0
        %v1461 = vld [vmem:[%s5] sm:$0xff]
        %v1462 = vld [vmem:[%s6] sm:$0xff]
        %1464 = vset.pattern.permute.xlu0 0
        %1465 = vperm.xlu0 %1464, %v1462
        %v1466 = vpop.permute.xlu0 %1465
        %v1469 = vsel %vm366, %v1461, 0
        %v1471 = vand.u32 %v1454, 4294901760
        %1472 = vmatprep.subr.mxu0 %v1471
        %v1473 = vand.u32 %v1453, 4294901760
        %1474 = vmatpush1.msra.mxu0 %v1473
        %v1475 = vand.u32 %v1458, 4294901760
        %1476 = vmatprep.subr.mxu0 %v1475
        %v1477 = vand.u32 %v1457, 4294901760
        %1478 = vmatpush1.msra.mxu0 %v1477
        %1479 = vmatprep.subr.mxu0 0.0
        %1480 = vmatpush1.msra.mxu0 0.0
        %1481 = vmatprep.subr.mxu0 0.0
        %1482 = vmatpush1.msra.mxu0 0.0
        %1483 = vmatprep.subr.mxu0 0.0
        %1484 = vmatpush1.msra.mxu0 0.0
        %1485 = vmatprep.subr.mxu0 0.0
        %1486 = vmatpush1.msra.mxu0 0.0
        %1487 = vmatprep.subr.mxu0 0.0
        %1488 = vmatpush1.msra.mxu0 0.0
        %1489 = vmatprep.subr.mxu0 0.0
        %1490 = vmatpush1.msra.mxu0 0.0
        %1491 = vmatprep.subr.mxu0 0.0
        %1492 = vmatpush1.msra.mxu0 0.0
        %1493 = vmatprep.subr.mxu0 0.0
        %1494 = vmatpush1.msra.mxu0 0.0
        %1495 = vmatprep.subr.mxu0 0.0
        %1496 = vmatpush1.msra.mxu0 0.0
        %1497 = vmatprep.subr.mxu0 0.0
        %1498 = vmatpush1.msra.mxu0 0.0
        %1499 = vmatprep.subr.mxu0 0.0
        %1500 = vmatpush1.msra.mxu0 0.0
        %1501 = vmatprep.subr.mxu0 0.0
        %1502 = vmatpush1.msra.mxu0 0.0
        %1503 = vmatprep.subr.mxu0 0.0
        %1504 = vmatpush1.msra.mxu0 0.0
        %1505 = vmatprep.subr.mxu0 0.0
        %1506 = vmatpush1.msra.mxu0 0.0
        %1507 = vmatprep.subr.mxu0 0.0
        %1508 = vmatpush1.msra.mxu0 0.0
        %1509 = vmatprep.subr.mxu0 0.0
        %1510 = vmatpush1.msra.mxu0 0.0
        %1511 = vmatprep.subr.mxu0 0.0
        %1512 = vmatpush1.msra.mxu0 0.0
        %1513 = vmatprep.subr.mxu0 0.0
        %1514 = vmatpush1.msra.mxu0 0.0
        %1515 = vmatprep.subr.mxu0 0.0
        %1516 = vmatpush1.msra.mxu0 0.0
        %1517 = vmatprep.subr.mxu0 0.0
        %1518 = vmatpush1.msra.mxu0 0.0
        %1519 = vmatprep.subr.mxu0 0.0
        %1520 = vmatpush1.msra.mxu0 0.0
        %1521 = vmatprep.subr.mxu0 0.0
        %1522 = vmatpush1.msra.mxu0 0.0
        %1523 = vmatprep.subr.mxu0 0.0
        %1524 = vmatpush1.msra.mxu0 0.0
        %1525 = vmatprep.subr.mxu0 0.0
        %1526 = vmatpush1.msra.mxu0 0.0
        %1527 = vmatprep.subr.mxu0 0.0
        %1528 = vmatpush1.msra.mxu0 0.0
        %1529 = vmatprep.subr.mxu0 0.0
        %1530 = vmatpush1.msra.mxu0 0.0
        %1531 = vmatprep.subr.mxu0 0.0
        %1532 = vmatpush1.msra.mxu0 0.0
        %1533 = vmatprep.subr.mxu0 0.0
        %1534 = vmatpush1.msra.mxu0 0.0
        %1535 = vmatprep.subr.mxu0 0.0
        %1536 = vmatpush1.msra.mxu0 0.0
        %1537 = vmatprep.subr.mxu0 0.0
        %1538 = vmatpush1.msra.mxu0 0.0
        %1539 = vmatprep.mubr.f32.mxu0 0.0
        %v1540 = vand.u32 %v1469, 4294901760
        %v1541 = vsub.f32 %v1469, %v1540
        %v1542 = vand.u32 %v1541, 4294901760
        %v1543 = vsub.f32 %v1541, %v1542
        %v1544 = vand.u32 %v1543, 4294901760
        %1545 = vmatmul.mubr.f32.gmra.mrb[0].mxu0 %v1544
        %v1546 = vpop.f32.mrb[0].mxu0
        %v1547 = vadd.f32 %v1466, %v1546
        %v1548 = vpop.f32.mrb[0].mxu0
        %v1549 = vadd.f32 %v1466, %v1548
        %1550 = vdwg.mxu0
        %v1551 = vand.u32 %v1454, 4294901760
        %v1552 = vsub.f32 %v1454, %v1551
        %v1553 = vand.u32 %v1552, 4294901760
        %v1554 = vsub.f32 %v1552, %v1553
        %v1555 = vand.u32 %v1554, 4294901760
        %1556 = vmatprep.subr.mxu0 %v1555
        %v1557 = vand.u32 %v1453, 4294901760
        %v1558 = vsub.f32 %v1453, %v1557
        %v1559 = vand.u32 %v1558, 4294901760
        %v1560 = vsub.f32 %v1558, %v1559
        %v1561 = vand.u32 %v1560, 4294901760
        %1562 = vmatpush1.msra.mxu0 %v1561
        %v1563 = vand.u32 %v1458, 4294901760
        %v1564 = vsub.f32 %v1458, %v1563
        %v1565 = vand.u32 %v1564, 4294901760
        %v1566 = vsub.f32 %v1564, %v1565
        %v1567 = vand.u32 %v1566, 4294901760
        %1568 = vmatprep.subr.mxu0 %v1567
        %v1569 = vand.u32 %v1457, 4294901760
        %v1570 = vsub.f32 %v1457, %v1569
        %v1571 = vand.u32 %v1570, 4294901760
        %v1572 = vsub.f32 %v1570, %v1571
        %v1573 = vand.u32 %v1572, 4294901760
        %1574 = vmatpush1.msra.mxu0 %v1573
        %1575 = vmatprep.subr.mxu0 0.0
        %1576 = vmatpush1.msra.mxu0 0.0
        %1577 = vmatprep.subr.mxu0 0.0
        %1578 = vmatpush1.msra.mxu0 0.0
        %1579 = vmatprep.subr.mxu0 0.0
        %1580 = vmatpush1.msra.mxu0 0.0
        %1581 = vmatprep.subr.mxu0 0.0
        %1582 = vmatpush1.msra.mxu0 0.0
        %1583 = vmatprep.subr.mxu0 0.0
        %1584 = vmatpush1.msra.mxu0 0.0
        %1585 = vmatprep.subr.mxu0 0.0
        %1586 = vmatpush1.msra.mxu0 0.0
        %1587 = vmatprep.subr.mxu0 0.0
        %1588 = vmatpush1.msra.mxu0 0.0
        %1589 = vmatprep.subr.mxu0 0.0
        %1590 = vmatpush1.msra.mxu0 0.0
        %1591 = vmatprep.subr.mxu0 0.0
        %1592 = vmatpush1.msra.mxu0 0.0
        %1593 = vmatprep.subr.mxu0 0.0
        %1594 = vmatpush1.msra.mxu0 0.0
        %1595 = vmatprep.subr.mxu0 0.0
        %1596 = vmatpush1.msra.mxu0 0.0
        %1597 = vmatprep.subr.mxu0 0.0
        %1598 = vmatpush1.msra.mxu0 0.0
        %1599 = vmatprep.subr.mxu0 0.0
        %1600 = vmatpush1.msra.mxu0 0.0
        %1601 = vmatprep.subr.mxu0 0.0
        %1602 = vmatpush1.msra.mxu0 0.0
        %1603 = vmatprep.subr.mxu0 0.0
        %1604 = vmatpush1.msra.mxu0 0.0
        %1605 = vmatprep.subr.mxu0 0.0
        %1606 = vmatpush1.msra.mxu0 0.0
        %1607 = vmatprep.subr.mxu0 0.0
        %1608 = vmatpush1.msra.mxu0 0.0
        %1609 = vmatprep.subr.mxu0 0.0
        %1610 = vmatpush1.msra.mxu0 0.0
        %1611 = vmatprep.subr.mxu0 0.0
        %1612 = vmatpush1.msra.mxu0 0.0
        %1613 = vmatprep.subr.mxu0 0.0
        %1614 = vmatpush1.msra.mxu0 0.0
        %1615 = vmatprep.subr.mxu0 0.0
        %1616 = vmatpush1.msra.mxu0 0.0
        %1617 = vmatprep.subr.mxu0 0.0
        %1618 = vmatpush1.msra.mxu0 0.0
        %1619 = vmatprep.subr.mxu0 0.0
        %1620 = vmatpush1.msra.mxu0 0.0
        %1621 = vmatprep.subr.mxu0 0.0
        %1622 = vmatpush1.msra.mxu0 0.0
        %1623 = vmatprep.subr.mxu0 0.0
        %1624 = vmatpush1.msra.mxu0 0.0
        %1625 = vmatprep.subr.mxu0 0.0
        %1626 = vmatpush1.msra.mxu0 0.0
        %1627 = vmatprep.subr.mxu0 0.0
        %1628 = vmatpush1.msra.mxu0 0.0
        %1629 = vmatprep.subr.mxu0 0.0
        %1630 = vmatpush1.msra.mxu0 0.0
        %1631 = vmatprep.subr.mxu0 0.0
        %1632 = vmatpush1.msra.mxu0 0.0
        %1633 = vmatprep.subr.mxu0 0.0
        %1634 = vmatpush1.msra.mxu0 0.0
        %1635 = vmatprep.mubr.f32.mxu0 0.0
        %v1636 = vand.u32 %v1469, 4294901760
        %1637 = vmatmul.mubr.f32.gmra.mrb[0].mxu0 %v1636
        %v1638 = vpop.f32.mrb[0].mxu0
        %v1639 = vadd.f32 %v1547, %v1638
        %v1640 = vpop.f32.mrb[0].mxu0
        %v1641 = vadd.f32 %v1549, %v1640
        %1642 = vdwg.mxu0
        %v1643 = vand.u32 %v1454, 4294901760
        %v1644 = vsub.f32 %v1454, %v1643
        %1645 = vmatprep.subr.mxu0 %v1644
        %v1646 = vand.u32 %v1453, 4294901760
        %v1647 = vsub.f32 %v1453, %v1646
        %1648 = vmatpush1.msra.mxu0 %v1647
        %v1649 = vand.u32 %v1458, 4294901760
        %v1650 = vsub.f32 %v1458, %v1649
        %1651 = vmatprep.subr.mxu0 %v1650
        %v1652 = vand.u32 %v1457, 4294901760
        %v1653 = vsub.f32 %v1457, %v1652
        %1654 = vmatpush1.msra.mxu0 %v1653
        %1655 = vmatprep.subr.mxu0 0.0
        %1656 = vmatpush1.msra.mxu0 0.0
        %1657 = vmatprep.subr.mxu0 0.0
        %1658 = vmatpush1.msra.mxu0 0.0
        %1659 = vmatprep.subr.mxu0 0.0
        %1660 = vmatpush1.msra.mxu0 0.0
        %1661 = vmatprep.subr.mxu0 0.0
        %1662 = vmatpush1.msra.mxu0 0.0
        %1663 = vmatprep.subr.mxu0 0.0
        %1664 = vmatpush1.msra.mxu0 0.0
        %1665 = vmatprep.subr.mxu0 0.0
        %1666 = vmatpush1.msra.mxu0 0.0
        %1667 = vmatprep.subr.mxu0 0.0
        %1668 = vmatpush1.msra.mxu0 0.0
        %1669 = vmatprep.subr.mxu0 0.0
        %1670 = vmatpush1.msra.mxu0 0.0
        %1671 = vmatprep.subr.mxu0 0.0
        %1672 = vmatpush1.msra.mxu0 0.0
        %1673 = vmatprep.subr.mxu0 0.0
        %1674 = vmatpush1.msra.mxu0 0.0
        %1675 = vmatprep.subr.mxu0 0.0
        %1676 = vmatpush1.msra.mxu0 0.0
        %1677 = vmatprep.subr.mxu0 0.0
        %1678 = vmatpush1.msra.mxu0 0.0
        %1679 = vmatprep.subr.mxu0 0.0
        %1680 = vmatpush1.msra.mxu0 0.0
        %1681 = vmatprep.subr.mxu0 0.0
        %1682 = vmatpush1.msra.mxu0 0.0
        %1683 = vmatprep.subr.mxu0 0.0
        %1684 = vmatpush1.msra.mxu0 0.0
        %1685 = vmatprep.subr.mxu0 0.0
        %1686 = vmatpush1.msra.mxu0 0.0
        %1687 = vmatprep.subr.mxu0 0.0
        %1688 = vmatpush1.msra.mxu0 0.0
        %1689 = vmatprep.subr.mxu0 0.0
        %1690 = vmatpush1.msra.mxu0 0.0
        %1691 = vmatprep.subr.mxu0 0.0
        %1692 = vmatpush1.msra.mxu0 0.0
        %1693 = vmatprep.subr.mxu0 0.0
        %1694 = vmatpush1.msra.mxu0 0.0
        %1695 = vmatprep.subr.mxu0 0.0
        %1696 = vmatpush1.msra.mxu0 0.0
        %1697 = vmatprep.subr.mxu0 0.0
        %1698 = vmatpush1.msra.mxu0 0.0
        %1699 = vmatprep.subr.mxu0 0.0
        %1700 = vmatpush1.msra.mxu0 0.0
        %1701 = vmatprep.subr.mxu0 0.0
        %1702 = vmatpush1.msra.mxu0 0.0
        %1703 = vmatprep.subr.mxu0 0.0
        %1704 = vmatpush1.msra.mxu0 0.0
        %1705 = vmatprep.subr.mxu0 0.0
        %1706 = vmatpush1.msra.mxu0 0.0
        %1707 = vmatprep.subr.mxu0 0.0
        %1708 = vmatpush1.msra.mxu0 0.0
        %1709 = vmatprep.subr.mxu0 0.0
        %1710 = vmatpush1.msra.mxu0 0.0
        %1711 = vmatprep.subr.mxu0 0.0
        %1712 = vmatpush1.msra.mxu0 0.0
        %1713 = vmatprep.subr.mxu0 0.0
        %1714 = vmatpush1.msra.mxu0 0.0
        %1715 = vmatprep.mubr.f32.mxu0 0.0
        %v1716 = vand.u32 %v1469, 4294901760
        %v1717 = vsub.f32 %v1469, %v1716
        %1718 = vmatmul.mubr.f32.gmra.mrb[0].mxu0 %v1717
        %v1719 = vpop.f32.mrb[0].mxu0
        %v1720 = vadd.f32 %v1639, %v1719
        %v1721 = vpop.f32.mrb[0].mxu0
        %v1722 = vadd.f32 %v1641, %v1721
        %1723 = vdwg.mxu0
        %v1724 = vand.u32 %v1454, 4294901760
        %1725 = vmatprep.subr.mxu0 %v1724
        %v1726 = vand.u32 %v1453, 4294901760
        %1727 = vmatpush1.msra.mxu0 %v1726
        %v1728 = vand.u32 %v1458, 4294901760
        %1729 = vmatprep.subr.mxu0 %v1728
        %v1730 = vand.u32 %v1457, 4294901760
        %1731 = vmatpush1.msra.mxu0 %v1730
        %1732 = vmatprep.subr.mxu0 0.0
        %1733 = vmatpush1.msra.mxu0 0.0
        %1734 = vmatprep.subr.mxu0 0.0
        %1735 = vmatpush1.msra.mxu0 0.0
        %1736 = vmatprep.subr.mxu0 0.0
        %1737 = vmatpush1.msra.mxu0 0.0
        %1738 = vmatprep.subr.mxu0 0.0
        %1739 = vmatpush1.msra.mxu0 0.0
        %1740 = vmatprep.subr.mxu0 0.0
        %1741 = vmatpush1.msra.mxu0 0.0
        %1742 = vmatprep.subr.mxu0 0.0
        %1743 = vmatpush1.msra.mxu0 0.0
        %1744 = vmatprep.subr.mxu0 0.0
        %1745 = vmatpush1.msra.mxu0 0.0
        %1746 = vmatprep.subr.mxu0 0.0
        %1747 = vmatpush1.msra.mxu0 0.0
        %1748 = vmatprep.subr.mxu0 0.0
        %1749 = vmatpush1.msra.mxu0 0.0
        %1750 = vmatprep.subr.mxu0 0.0
        %1751 = vmatpush1.msra.mxu0 0.0
        %1752 = vmatprep.subr.mxu0 0.0
        %1753 = vmatpush1.msra.mxu0 0.0
        %1754 = vmatprep.subr.mxu0 0.0
        %1755 = vmatpush1.msra.mxu0 0.0
        %1756 = vmatprep.subr.mxu0 0.0
        %1757 = vmatpush1.msra.mxu0 0.0
        %1758 = vmatprep.subr.mxu0 0.0
        %1759 = vmatpush1.msra.mxu0 0.0
        %1760 = vmatprep.subr.mxu0 0.0
        %1761 = vmatpush1.msra.mxu0 0.0
        %1762 = vmatprep.subr.mxu0 0.0
        %1763 = vmatpush1.msra.mxu0 0.0
        %1764 = vmatprep.subr.mxu0 0.0
        %1765 = vmatpush1.msra.mxu0 0.0
        %1766 = vmatprep.subr.mxu0 0.0
        %1767 = vmatpush1.msra.mxu0 0.0
        %1768 = vmatprep.subr.mxu0 0.0
        %1769 = vmatpush1.msra.mxu0 0.0
        %1770 = vmatprep.subr.mxu0 0.0
        %1771 = vmatpush1.msra.mxu0 0.0
        %1772 = vmatprep.subr.mxu0 0.0
        %1773 = vmatpush1.msra.mxu0 0.0
        %1774 = vmatprep.subr.mxu0 0.0
        %1775 = vmatpush1.msra.mxu0 0.0
        %1776 = vmatprep.subr.mxu0 0.0
        %1777 = vmatpush1.msra.mxu0 0.0
        %1778 = vmatprep.subr.mxu0 0.0
        %1779 = vmatpush1.msra.mxu0 0.0
        %1780 = vmatprep.subr.mxu0 0.0
        %1781 = vmatpush1.msra.mxu0 0.0
        %1782 = vmatprep.subr.mxu0 0.0
        %1783 = vmatpush1.msra.mxu0 0.0
        %1784 = vmatprep.subr.mxu0 0.0
        %1785 = vmatpush1.msra.mxu0 0.0
        %1786 = vmatprep.subr.mxu0 0.0
        %1787 = vmatpush1.msra.mxu0 0.0
        %1788 = vmatprep.subr.mxu0 0.0
        %1789 = vmatpush1.msra.mxu0 0.0
        %1790 = vmatprep.subr.mxu0 0.0
        %1791 = vmatpush1.msra.mxu0 0.0
        %1792 = vmatprep.mubr.f32.mxu0 0.0
        %v1793 = vand.u32 %v1469, 4294901760
        %v1794 = vsub.f32 %v1469, %v1793
        %v1795 = vand.u32 %v1794, 4294901760
        %1796 = vmatmul.mubr.f32.gmra.mrb[0].mxu0 %v1795
        %v1797 = vpop.f32.mrb[0].mxu0
        %v1798 = vadd.f32 %v1720, %v1797
        %v1799 = vpop.f32.mrb[0].mxu0
        %v1800 = vadd.f32 %v1722, %v1799
        %1801 = vdwg.mxu0
        %v1802 = vand.u32 %v1454, 4294901760
        %v1803 = vsub.f32 %v1454, %v1802
        %v1804 = vand.u32 %v1803, 4294901760
        %1805 = vmatprep.subr.mxu0 %v1804
        %v1806 = vand.u32 %v1453, 4294901760
        %v1807 = vsub.f32 %v1453, %v1806
        %v1808 = vand.u32 %v1807, 4294901760
        %1809 = vmatpush1.msra.mxu0 %v1808
        %v1810 = vand.u32 %v1458, 4294901760
        %v1811 = vsub.f32 %v1458, %v1810
        %v1812 = vand.u32 %v1811, 4294901760
        %1813 = vmatprep.subr.mxu0 %v1812
        %v1814 = vand.u32 %v1457, 4294901760
        %v1815 = vsub.f32 %v1457, %v1814
        %v1816 = vand.u32 %v1815, 4294901760
        %1817 = vmatpush1.msra.mxu0 %v1816
        %1818 = vmatprep.subr.mxu0 0.0
        %1819 = vmatpush1.msra.mxu0 0.0
        %1820 = vmatprep.subr.mxu0 0.0
        %1821 = vmatpush1.msra.mxu0 0.0
        %1822 = vmatprep.subr.mxu0 0.0
        %1823 = vmatpush1.msra.mxu0 0.0
        %1824 = vmatprep.subr.mxu0 0.0
        %1825 = vmatpush1.msra.mxu0 0.0
        %1826 = vmatprep.subr.mxu0 0.0
        %1827 = vmatpush1.msra.mxu0 0.0
        %1828 = vmatprep.subr.mxu0 0.0
        %1829 = vmatpush1.msra.mxu0 0.0
        %1830 = vmatprep.subr.mxu0 0.0
        %1831 = vmatpush1.msra.mxu0 0.0
        %1832 = vmatprep.subr.mxu0 0.0
        %1833 = vmatpush1.msra.mxu0 0.0
        %1834 = vmatprep.subr.mxu0 0.0
        %1835 = vmatpush1.msra.mxu0 0.0
        %1836 = vmatprep.subr.mxu0 0.0
        %1837 = vmatpush1.msra.mxu0 0.0
        %1838 = vmatprep.subr.mxu0 0.0
        %1839 = vmatpush1.msra.mxu0 0.0
        %1840 = vmatprep.subr.mxu0 0.0
        %1841 = vmatpush1.msra.mxu0 0.0
        %1842 = vmatprep.subr.mxu0 0.0
        %1843 = vmatpush1.msra.mxu0 0.0
        %1844 = vmatprep.subr.mxu0 0.0
        %1845 = vmatpush1.msra.mxu0 0.0
        %1846 = vmatprep.subr.mxu0 0.0
        %1847 = vmatpush1.msra.mxu0 0.0
        %1848 = vmatprep.subr.mxu0 0.0
        %1849 = vmatpush1.msra.mxu0 0.0
        %1850 = vmatprep.subr.mxu0 0.0
        %1851 = vmatpush1.msra.mxu0 0.0
        %1852 = vmatprep.subr.mxu0 0.0
        %1853 = vmatpush1.msra.mxu0 0.0
        %1854 = vmatprep.subr.mxu0 0.0
        %1855 = vmatpush1.msra.mxu0 0.0
        %1856 = vmatprep.subr.mxu0 0.0
        %1857 = vmatpush1.msra.mxu0 0.0
        %1858 = vmatprep.subr.mxu0 0.0
        %1859 = vmatpush1.msra.mxu0 0.0
        %1860 = vmatprep.subr.mxu0 0.0
        %1861 = vmatpush1.msra.mxu0 0.0
        %1862 = vmatprep.subr.mxu0 0.0
        %1863 = vmatpush1.msra.mxu0 0.0
        %1864 = vmatprep.subr.mxu0 0.0
        %1865 = vmatpush1.msra.mxu0 0.0
        %1866 = vmatprep.subr.mxu0 0.0
        %1867 = vmatpush1.msra.mxu0 0.0
        %1868 = vmatprep.subr.mxu0 0.0
        %1869 = vmatpush1.msra.mxu0 0.0
        %1870 = vmatprep.subr.mxu0 0.0
        %1871 = vmatpush1.msra.mxu0 0.0
        %1872 = vmatprep.subr.mxu0 0.0
        %1873 = vmatpush1.msra.mxu0 0.0
        %1874 = vmatprep.subr.mxu0 0.0
        %1875 = vmatpush1.msra.mxu0 0.0
        %1876 = vmatprep.subr.mxu0 0.0
        %1877 = vmatpush1.msra.mxu0 0.0
        %1878 = vmatprep.mubr.f32.mxu0 0.0
        %v1879 = vand.u32 %v1469, 4294901760
        %1880 = vmatmul.mubr.f32.gmra.mrb[0].mxu0 %v1879
        %v1881 = vpop.f32.mrb[0].mxu0
        %v1882 = vadd.f32 %v1798, %v1881
        %v1883 = vpop.f32.mrb[0].mxu0
        %v1884 = vadd.f32 %v1800, %v1883
        %1885 = vdwg.mxu0
        %v1886 = vand.u32 %v1454, 4294901760
        %1887 = vmatprep.subr.mxu0 %v1886
        %v1888 = vand.u32 %v1453, 4294901760
        %1889 = vmatpush1.msra.mxu0 %v1888
        %v1890 = vand.u32 %v1458, 4294901760
        %1891 = vmatprep.subr.mxu0 %v1890
        %v1892 = vand.u32 %v1457, 4294901760
        %1893 = vmatpush1.msra.mxu0 %v1892
        %1894 = vmatprep.subr.mxu0 0.0
        %1895 = vmatpush1.msra.mxu0 0.0
        %1896 = vmatprep.subr.mxu0 0.0
        %1897 = vmatpush1.msra.mxu0 0.0
        %1898 = vmatprep.subr.mxu0 0.0
        %1899 = vmatpush1.msra.mxu0 0.0
        %1900 = vmatprep.subr.mxu0 0.0
        %1901 = vmatpush1.msra.mxu0 0.0
        %1902 = vmatprep.subr.mxu0 0.0
        %1903 = vmatpush1.msra.mxu0 0.0
        %1904 = vmatprep.subr.mxu0 0.0
        %1905 = vmatpush1.msra.mxu0 0.0
        %1906 = vmatprep.subr.mxu0 0.0
        %1907 = vmatpush1.msra.mxu0 0.0
        %1908 = vmatprep.subr.mxu0 0.0
        %1909 = vmatpush1.msra.mxu0 0.0
        %1910 = vmatprep.subr.mxu0 0.0
        %1911 = vmatpush1.msra.mxu0 0.0
        %1912 = vmatprep.subr.mxu0 0.0
        %1913 = vmatpush1.msra.mxu0 0.0
        %1914 = vmatprep.subr.mxu0 0.0
        %1915 = vmatpush1.msra.mxu0 0.0
        %1916 = vmatprep.subr.mxu0 0.0
        %1917 = vmatpush1.msra.mxu0 0.0
        %1918 = vmatprep.subr.mxu0 0.0
        %1919 = vmatpush1.msra.mxu0 0.0
        %1920 = vmatprep.subr.mxu0 0.0
        %1921 = vmatpush1.msra.mxu0 0.0
        %1922 = vmatprep.subr.mxu0 0.0
        %1923 = vmatpush1.msra.mxu0 0.0
        %1924 = vmatprep.subr.mxu0 0.0
        %1925 = vmatpush1.msra.mxu0 0.0
        %1926 = vmatprep.subr.mxu0 0.0
        %1927 = vmatpush1.msra.mxu0 0.0
        %1928 = vmatprep.subr.mxu0 0.0
        %1929 = vmatpush1.msra.mxu0 0.0
        %1930 = vmatprep.subr.mxu0 0.0
        %1931 = vmatpush1.msra.mxu0 0.0
        %1932 = vmatprep.subr.mxu0 0.0
        %1933 = vmatpush1.msra.mxu0 0.0
        %1934 = vmatprep.subr.mxu0 0.0
        %1935 = vmatpush1.msra.mxu0 0.0
        %1936 = vmatprep.subr.mxu0 0.0
        %1937 = vmatpush1.msra.mxu0 0.0
        %1938 = vmatprep.subr.mxu0 0.0
        %1939 = vmatpush1.msra.mxu0 0.0
        %1940 = vmatprep.subr.mxu0 0.0
        %1941 = vmatpush1.msra.mxu0 0.0
        %1942 = vmatprep.subr.mxu0 0.0
        %1943 = vmatpush1.msra.mxu0 0.0
        %1944 = vmatprep.subr.mxu0 0.0
        %1945 = vmatpush1.msra.mxu0 0.0
        %1946 = vmatprep.subr.mxu0 0.0
        %1947 = vmatpush1.msra.mxu0 0.0
        %1948 = vmatprep.subr.mxu0 0.0
        %1949 = vmatpush1.msra.mxu0 0.0
        %1950 = vmatprep.subr.mxu0 0.0
        %1951 = vmatpush1.msra.mxu0 0.0
        %1952 = vmatprep.subr.mxu0 0.0
        %1953 = vmatpush1.msra.mxu0 0.0
        %1954 = vmatprep.mubr.f32.mxu0 0.0
        %v1955 = vand.u32 %v1469, 4294901760
        %1956 = vmatmul.mubr.f32.gmra.mrb[0].mxu0 %v1955
        %v1957 = vpop.f32.mrb[0].mxu0
        %v1958 = vadd.f32 %v1882, %v1957
        %v1959 = vpop.f32.mrb[0].mxu0
        %v1960 = vadd.f32 %v1884, %v1959
        %1961 = vdwg.mxu0
        %v1962 = vand.u32 %v1456, 4294901760
        %1963 = vmatprep.subr.mxu0 %v1962
        %v1964 = vand.u32 %v1455, 4294901760
        %1965 = vmatpush1.msra.mxu0 %v1964
        %v1966 = vand.u32 %v1460, 4294901760
        %1967 = vmatprep.subr.mxu0 %v1966
        %v1968 = vand.u32 %v1459, 4294901760
        %1969 = vmatpush1.msra.mxu0 %v1968
        %1970 = vmatprep.subr.mxu0 0.0
        %1971 = vmatpush1.msra.mxu0 0.0
        %1972 = vmatprep.subr.mxu0 0.0
        %1973 = vmatpush1.msra.mxu0 0.0
        %1974 = vmatprep.subr.mxu0 0.0
        %1975 = vmatpush1.msra.mxu0 0.0
        %1976 = vmatprep.subr.mxu0 0.0
        %1977 = vmatpush1.msra.mxu0 0.0
        %1978 = vmatprep.subr.mxu0 0.0
        %1979 = vmatpush1.msra.mxu0 0.0
        %1980 = vmatprep.subr.mxu0 0.0
        %1981 = vmatpush1.msra.mxu0 0.0
        %1982 = vmatprep.subr.mxu0 0.0
        %1983 = vmatpush1.msra.mxu0 0.0
        %1984 = vmatprep.subr.mxu0 0.0
        %1985 = vmatpush1.msra.mxu0 0.0
        %1986 = vmatprep.subr.mxu0 0.0
        %1987 = vmatpush1.msra.mxu0 0.0
        %1988 = vmatprep.subr.mxu0 0.0
        %1989 = vmatpush1.msra.mxu0 0.0
        %1990 = vmatprep.subr.mxu0 0.0
        %1991 = vmatpush1.msra.mxu0 0.0
        %1992 = vmatprep.subr.mxu0 0.0
        %1993 = vmatpush1.msra.mxu0 0.0
        %1994 = vmatprep.subr.mxu0 0.0
        %1995 = vmatpush1.msra.mxu0 0.0
        %1996 = vmatprep.subr.mxu0 0.0
        %1997 = vmatpush1.msra.mxu0 0.0
        %1998 = vmatprep.subr.mxu0 0.0
        %1999 = vmatpush1.msra.mxu0 0.0
        %2000 = vmatprep.subr.mxu0 0.0
        %2001 = vmatpush1.msra.mxu0 0.0
        %2002 = vmatprep.subr.mxu0 0.0
        %2003 = vmatpush1.msra.mxu0 0.0
        %2004 = vmatprep.subr.mxu0 0.0
        %2005 = vmatpush1.msra.mxu0 0.0
        %2006 = vmatprep.subr.mxu0 0.0
        %2007 = vmatpush1.msra.mxu0 0.0
        %2008 = vmatprep.subr.mxu0 0.0
        %2009 = vmatpush1.msra.mxu0 0.0
        %2010 = vmatprep.subr.mxu0 0.0
        %2011 = vmatpush1.msra.mxu0 0.0
        %2012 = vmatprep.subr.mxu0 0.0
        %2013 = vmatpush1.msra.mxu0 0.0
        %2014 = vmatprep.subr.mxu0 0.0
        %2015 = vmatpush1.msra.mxu0 0.0
        %2016 = vmatprep.subr.mxu0 0.0
        %2017 = vmatpush1.msra.mxu0 0.0
        %2018 = vmatprep.subr.mxu0 0.0
        %2019 = vmatpush1.msra.mxu0 0.0
        %2020 = vmatprep.subr.mxu0 0.0
        %2021 = vmatpush1.msra.mxu0 0.0
        %2022 = vmatprep.subr.mxu0 0.0
        %2023 = vmatpush1.msra.mxu0 0.0
        %2024 = vmatprep.subr.mxu0 0.0
        %2025 = vmatpush1.msra.mxu0 0.0
        %2026 = vmatprep.subr.mxu0 0.0
        %2027 = vmatpush1.msra.mxu0 0.0
        %2028 = vmatprep.subr.mxu0 0.0
        %2029 = vmatpush1.msra.mxu0 0.0
        %2030 = vmatprep.mubr.f32.mxu0 0.0
        %v2031 = vand.u32 %v1469, 4294901760
        %v2032 = vsub.f32 %v1469, %v2031
        %v2033 = vand.u32 %v2032, 4294901760
        %v2034 = vsub.f32 %v2032, %v2033
        %v2035 = vand.u32 %v2034, 4294901760
        %2036 = vmatmul.mubr.f32.gmra.mrb[0].mxu0 %v2035
        %v2037 = vpop.f32.mrb[0].mxu0
        %v2038 = vadd.f32 %v1466, %v2037
        %v2039 = vpop.f32.mrb[0].mxu0
        %v2040 = vadd.f32 %v1466, %v2039
        %2041 = vdwg.mxu0
        %v2042 = vand.u32 %v1456, 4294901760
        %v2043 = vsub.f32 %v1456, %v2042
        %v2044 = vand.u32 %v2043, 4294901760
        %v2045 = vsub.f32 %v2043, %v2044
        %v2046 = vand.u32 %v2045, 4294901760
        %2047 = vmatprep.subr.mxu0 %v2046
        %v2048 = vand.u32 %v1455, 4294901760
        %v2049 = vsub.f32 %v1455, %v2048
        %v2050 = vand.u32 %v2049, 4294901760
        %v2051 = vsub.f32 %v2049, %v2050
        %v2052 = vand.u32 %v2051, 4294901760
        %2053 = vmatpush1.msra.mxu0 %v2052
        %v2054 = vand.u32 %v1460, 4294901760
        %v2055 = vsub.f32 %v1460, %v2054
        %v2056 = vand.u32 %v2055, 4294901760
        %v2057 = vsub.f32 %v2055, %v2056
        %v2058 = vand.u32 %v2057, 4294901760
        %2059 = vmatprep.subr.mxu0 %v2058
        %v2060 = vand.u32 %v1459, 4294901760
        %v2061 = vsub.f32 %v1459, %v2060
        %v2062 = vand.u32 %v2061, 4294901760
        %v2063 = vsub.f32 %v2061, %v2062
        %v2064 = vand.u32 %v2063, 4294901760
        %2065 = vmatpush1.msra.mxu0 %v2064
        %2066 = vmatprep.subr.mxu0 0.0
        %2067 = vmatpush1.msra.mxu0 0.0
        %2068 = vmatprep.subr.mxu0 0.0
        %2069 = vmatpush1.msra.mxu0 0.0
        %2070 = vmatprep.subr.mxu0 0.0
        %2071 = vmatpush1.msra.mxu0 0.0
        %2072 = vmatprep.subr.mxu0 0.0
        %2073 = vmatpush1.msra.mxu0 0.0
        %2074 = vmatprep.subr.mxu0 0.0
        %2075 = vmatpush1.msra.mxu0 0.0
        %2076 = vmatprep.subr.mxu0 0.0
        %2077 = vmatpush1.msra.mxu0 0.0
        %2078 = vmatprep.subr.mxu0 0.0
        %2079 = vmatpush1.msra.mxu0 0.0
        %2080 = vmatprep.subr.mxu0 0.0
        %2081 = vmatpush1.msra.mxu0 0.0
        %2082 = vmatprep.subr.mxu0 0.0
        %2083 = vmatpush1.msra.mxu0 0.0
        %2084 = vmatprep.subr.mxu0 0.0
        %2085 = vmatpush1.msra.mxu0 0.0
        %2086 = vmatprep.subr.mxu0 0.0
        %2087 = vmatpush1.msra.mxu0 0.0
        %2088 = vmatprep.subr.mxu0 0.0
        %2089 = vmatpush1.msra.mxu0 0.0
        %2090 = vmatprep.subr.mxu0 0.0
        %2091 = vmatpush1.msra.mxu0 0.0
        %2092 = vmatprep.subr.mxu0 0.0
        %2093 = vmatpush1.msra.mxu0 0.0
        %2094 = vmatprep.subr.mxu0 0.0
        %2095 = vmatpush1.msra.mxu0 0.0
        %2096 = vmatprep.subr.mxu0 0.0
        %2097 = vmatpush1.msra.mxu0 0.0
        %2098 = vmatprep.subr.mxu0 0.0
        %2099 = vmatpush1.msra.mxu0 0.0
        %2100 = vmatprep.subr.mxu0 0.0
        %2101 = vmatpush1.msra.mxu0 0.0
        %2102 = vmatprep.subr.mxu0 0.0
        %2103 = vmatpush1.msra.mxu0 0.0
        %2104 = vmatprep.subr.mxu0 0.0
        %2105 = vmatpush1.msra.mxu0 0.0
        %2106 = vmatprep.subr.mxu0 0.0
        %2107 = vmatpush1.msra.mxu0 0.0
        %2108 = vmatprep.subr.mxu0 0.0
        %2109 = vmatpush1.msra.mxu0 0.0
        %2110 = vmatprep.subr.mxu0 0.0
        %2111 = vmatpush1.msra.mxu0 0.0
        %2112 = vmatprep.subr.mxu0 0.0
        %2113 = vmatpush1.msra.mxu0 0.0
        %2114 = vmatprep.subr.mxu0 0.0
        %2115 = vmatpush1.msra.mxu0 0.0
        %2116 = vmatprep.subr.mxu0 0.0
        %2117 = vmatpush1.msra.mxu0 0.0
        %2118 = vmatprep.subr.mxu0 0.0
        %2119 = vmatpush1.msra.mxu0 0.0
        %2120 = vmatprep.subr.mxu0 0.0
        %2121 = vmatpush1.msra.mxu0 0.0
        %2122 = vmatprep.subr.mxu0 0.0
        %2123 = vmatpush1.msra.mxu0 0.0
        %2124 = vmatprep.subr.mxu0 0.0
        %2125 = vmatpush1.msra.mxu0 0.0
        %2126 = vmatprep.mubr.f32.mxu0 0.0
        %v2127 = vand.u32 %v1469, 4294901760
        %2128 = vmatmul.mubr.f32.gmra.mrb[0].mxu0 %v2127
        %v2129 = vpop.f32.mrb[0].mxu0
        %v2130 = vadd.f32 %v2038, %v2129
        %v2131 = vpop.f32.mrb[0].mxu0
        %v2132 = vadd.f32 %v2040, %v2131
        %2133 = vdwg.mxu0
        %v2134 = vand.u32 %v1456, 4294901760
        %v2135 = vsub.f32 %v1456, %v2134
        %2136 = vmatprep.subr.mxu0 %v2135
        %v2137 = vand.u32 %v1455, 4294901760
        %v2138 = vsub.f32 %v1455, %v2137
        %2139 = vmatpush1.msra.mxu0 %v2138
        %v2140 = vand.u32 %v1460, 4294901760
        %v2141 = vsub.f32 %v1460, %v2140
        %2142 = vmatprep.subr.mxu0 %v2141
        %v2143 = vand.u32 %v1459, 4294901760
        %v2144 = vsub.f32 %v1459, %v2143
        %2145 = vmatpush1.msra.mxu0 %v2144
        %2146 = vmatprep.subr.mxu0 0.0
        %2147 = vmatpush1.msra.mxu0 0.0
        %2148 = vmatprep.subr.mxu0 0.0
        %2149 = vmatpush1.msra.mxu0 0.0
        %2150 = vmatprep.subr.mxu0 0.0
        %2151 = vmatpush1.msra.mxu0 0.0
        %2152 = vmatprep.subr.mxu0 0.0
        %2153 = vmatpush1.msra.mxu0 0.0
        %2154 = vmatprep.subr.mxu0 0.0
        %2155 = vmatpush1.msra.mxu0 0.0
        %2156 = vmatprep.subr.mxu0 0.0
        %2157 = vmatpush1.msra.mxu0 0.0
        %2158 = vmatprep.subr.mxu0 0.0
        %2159 = vmatpush1.msra.mxu0 0.0
        %2160 = vmatprep.subr.mxu0 0.0
        %2161 = vmatpush1.msra.mxu0 0.0
        %2162 = vmatprep.subr.mxu0 0.0
        %2163 = vmatpush1.msra.mxu0 0.0
        %2164 = vmatprep.subr.mxu0 0.0
        %2165 = vmatpush1.msra.mxu0 0.0
        %2166 = vmatprep.subr.mxu0 0.0
        %2167 = vmatpush1.msra.mxu0 0.0
        %2168 = vmatprep.subr.mxu0 0.0
        %2169 = vmatpush1.msra.mxu0 0.0
        %2170 = vmatprep.subr.mxu0 0.0
        %2171 = vmatpush1.msra.mxu0 0.0
        %2172 = vmatprep.subr.mxu0 0.0
        %2173 = vmatpush1.msra.mxu0 0.0
        %2174 = vmatprep.subr.mxu0 0.0
        %2175 = vmatpush1.msra.mxu0 0.0
        %2176 = vmatprep.subr.mxu0 0.0
        %2177 = vmatpush1.msra.mxu0 0.0
        %2178 = vmatprep.subr.mxu0 0.0
        %2179 = vmatpush1.msra.mxu0 0.0
        %2180 = vmatprep.subr.mxu0 0.0
        %2181 = vmatpush1.msra.mxu0 0.0
        %2182 = vmatprep.subr.mxu0 0.0
        %2183 = vmatpush1.msra.mxu0 0.0
        %2184 = vmatprep.subr.mxu0 0.0
        %2185 = vmatpush1.msra.mxu0 0.0
        %2186 = vmatprep.subr.mxu0 0.0
        %2187 = vmatpush1.msra.mxu0 0.0
        %2188 = vmatprep.subr.mxu0 0.0
        %2189 = vmatpush1.msra.mxu0 0.0
        %2190 = vmatprep.subr.mxu0 0.0
        %2191 = vmatpush1.msra.mxu0 0.0
        %2192 = vmatprep.subr.mxu0 0.0
        %2193 = vmatpush1.msra.mxu0 0.0
        %2194 = vmatprep.subr.mxu0 0.0
        %2195 = vmatpush1.msra.mxu0 0.0
        %2196 = vmatprep.subr.mxu0 0.0
        %2197 = vmatpush1.msra.mxu0 0.0
        %2198 = vmatprep.subr.mxu0 0.0
        %2199 = vmatpush1.msra.mxu0 0.0
        %2200 = vmatprep.subr.mxu0 0.0
        %2201 = vmatpush1.msra.mxu0 0.0
        %2202 = vmatprep.subr.mxu0 0.0
        %2203 = vmatpush1.msra.mxu0 0.0
        %2204 = vmatprep.subr.mxu0 0.0
        %2205 = vmatpush1.msra.mxu0 0.0
        %2206 = vmatprep.mubr.f32.mxu0 0.0
        %v2207 = vand.u32 %v1469, 4294901760
        %v2208 = vsub.f32 %v1469, %v2207
        %2209 = vmatmul.mubr.f32.gmra.mrb[0].mxu0 %v2208
        %v2210 = vpop.f32.mrb[0].mxu0
        %v2211 = vadd.f32 %v2130, %v2210
        %v2212 = vpop.f32.mrb[0].mxu0
        %v2213 = vadd.f32 %v2132, %v2212
        %2214 = vdwg.mxu0
        %v2215 = vand.u32 %v1456, 4294901760
        %2216 = vmatprep.subr.mxu0 %v2215
        %v2217 = vand.u32 %v1455, 4294901760
        %2218 = vmatpush1.msra.mxu0 %v2217
        %v2219 = vand.u32 %v1460, 4294901760
        %2220 = vmatprep.subr.mxu0 %v2219
        %v2221 = vand.u32 %v1459, 4294901760
        %2222 = vmatpush1.msra.mxu0 %v2221
        %2223 = vmatprep.subr.mxu0 0.0
        %2224 = vmatpush1.msra.mxu0 0.0
        %2225 = vmatprep.subr.mxu0 0.0
        %2226 = vmatpush1.msra.mxu0 0.0
        %2227 = vmatprep.subr.mxu0 0.0
        %2228 = vmatpush1.msra.mxu0 0.0
        %2229 = vmatprep.subr.mxu0 0.0
        %2230 = vmatpush1.msra.mxu0 0.0
        %2231 = vmatprep.subr.mxu0 0.0
        %2232 = vmatpush1.msra.mxu0 0.0
        %2233 = vmatprep.subr.mxu0 0.0
        %2234 = vmatpush1.msra.mxu0 0.0
        %2235 = vmatprep.subr.mxu0 0.0
        %2236 = vmatpush1.msra.mxu0 0.0
        %2237 = vmatprep.subr.mxu0 0.0
        %2238 = vmatpush1.msra.mxu0 0.0
        %2239 = vmatprep.subr.mxu0 0.0
        %2240 = vmatpush1.msra.mxu0 0.0
        %2241 = vmatprep.subr.mxu0 0.0
        %2242 = vmatpush1.msra.mxu0 0.0
        %2243 = vmatprep.subr.mxu0 0.0
        %2244 = vmatpush1.msra.mxu0 0.0
        %2245 = vmatprep.subr.mxu0 0.0
        %2246 = vmatpush1.msra.mxu0 0.0
        %2247 = vmatprep.subr.mxu0 0.0
        %2248 = vmatpush1.msra.mxu0 0.0
        %2249 = vmatprep.subr.mxu0 0.0
        %2250 = vmatpush1.msra.mxu0 0.0
        %2251 = vmatprep.subr.mxu0 0.0
        %2252 = vmatpush1.msra.mxu0 0.0
        %2253 = vmatprep.subr.mxu0 0.0
        %2254 = vmatpush1.msra.mxu0 0.0
        %2255 = vmatprep.subr.mxu0 0.0
        %2256 = vmatpush1.msra.mxu0 0.0
        %2257 = vmatprep.subr.mxu0 0.0
        %2258 = vmatpush1.msra.mxu0 0.0
        %2259 = vmatprep.subr.mxu0 0.0
        %2260 = vmatpush1.msra.mxu0 0.0
        %2261 = vmatprep.subr.mxu0 0.0
        %2262 = vmatpush1.msra.mxu0 0.0
        %2263 = vmatprep.subr.mxu0 0.0
        %2264 = vmatpush1.msra.mxu0 0.0
        %2265 = vmatprep.subr.mxu0 0.0
        %2266 = vmatpush1.msra.mxu0 0.0
        %2267 = vmatprep.subr.mxu0 0.0
        %2268 = vmatpush1.msra.mxu0 0.0
        %2269 = vmatprep.subr.mxu0 0.0
        %2270 = vmatpush1.msra.mxu0 0.0
        %2271 = vmatprep.subr.mxu0 0.0
        %2272 = vmatpush1.msra.mxu0 0.0
        %2273 = vmatprep.subr.mxu0 0.0
        %2274 = vmatpush1.msra.mxu0 0.0
        %2275 = vmatprep.subr.mxu0 0.0
        %2276 = vmatpush1.msra.mxu0 0.0
        %2277 = vmatprep.subr.mxu0 0.0
        %2278 = vmatpush1.msra.mxu0 0.0
        %2279 = vmatprep.subr.mxu0 0.0
        %2280 = vmatpush1.msra.mxu0 0.0
        %2281 = vmatprep.subr.mxu0 0.0
        %2282 = vmatpush1.msra.mxu0 0.0
        %2283 = vmatprep.mubr.f32.mxu0 0.0
        %v2284 = vand.u32 %v1469, 4294901760
        %v2285 = vsub.f32 %v1469, %v2284
        %v2286 = vand.u32 %v2285, 4294901760
        %2287 = vmatmul.mubr.f32.gmra.mrb[0].mxu0 %v2286
        %v2288 = vpop.f32.mrb[0].mxu0
        %v2289 = vadd.f32 %v2211, %v2288
        %v2290 = vpop.f32.mrb[0].mxu0
        %v2291 = vadd.f32 %v2213, %v2290
        %2292 = vdwg.mxu0
        %v2293 = vand.u32 %v1456, 4294901760
        %v2294 = vsub.f32 %v1456, %v2293
        %v2295 = vand.u32 %v2294, 4294901760
        %2296 = vmatprep.subr.mxu0 %v2295
        %v2297 = vand.u32 %v1455, 4294901760
        %v2298 = vsub.f32 %v1455, %v2297
        %v2299 = vand.u32 %v2298, 4294901760
        %2300 = vmatpush1.msra.mxu0 %v2299
        %v2301 = vand.u32 %v1460, 4294901760
        %v2302 = vsub.f32 %v1460, %v2301
        %v2303 = vand.u32 %v2302, 4294901760
        %2304 = vmatprep.subr.mxu0 %v2303
        %v2305 = vand.u32 %v1459, 4294901760
        %v2306 = vsub.f32 %v1459, %v2305
        %v2307 = vand.u32 %v2306, 4294901760
        %2308 = vmatpush1.msra.mxu0 %v2307
        %2309 = vmatprep.subr.mxu0 0.0
        %2310 = vmatpush1.msra.mxu0 0.0
        %2311 = vmatprep.subr.mxu0 0.0
        %2312 = vmatpush1.msra.mxu0 0.0
        %2313 = vmatprep.subr.mxu0 0.0
        %2314 = vmatpush1.msra.mxu0 0.0
        %2315 = vmatprep.subr.mxu0 0.0
        %2316 = vmatpush1.msra.mxu0 0.0
        %2317 = vmatprep.subr.mxu0 0.0
        %2318 = vmatpush1.msra.mxu0 0.0
        %2319 = vmatprep.subr.mxu0 0.0
        %2320 = vmatpush1.msra.mxu0 0.0
        %2321 = vmatprep.subr.mxu0 0.0
        %2322 = vmatpush1.msra.mxu0 0.0
        %2323 = vmatprep.subr.mxu0 0.0
        %2324 = vmatpush1.msra.mxu0 0.0
        %2325 = vmatprep.subr.mxu0 0.0
        %2326 = vmatpush1.msra.mxu0 0.0
        %2327 = vmatprep.subr.mxu0 0.0
        %2328 = vmatpush1.msra.mxu0 0.0
        %2329 = vmatprep.subr.mxu0 0.0
        %2330 = vmatpush1.msra.mxu0 0.0
        %2331 = vmatprep.subr.mxu0 0.0
        %2332 = vmatpush1.msra.mxu0 0.0
        %2333 = vmatprep.subr.mxu0 0.0
        %2334 = vmatpush1.msra.mxu0 0.0
        %2335 = vmatprep.subr.mxu0 0.0
        %2336 = vmatpush1.msra.mxu0 0.0
        %2337 = vmatprep.subr.mxu0 0.0
        %2338 = vmatpush1.msra.mxu0 0.0
        %2339 = vmatprep.subr.mxu0 0.0
        %2340 = vmatpush1.msra.mxu0 0.0
        %2341 = vmatprep.subr.mxu0 0.0
        %2342 = vmatpush1.msra.mxu0 0.0
        %2343 = vmatprep.subr.mxu0 0.0
        %2344 = vmatpush1.msra.mxu0 0.0
        %2345 = vmatprep.subr.mxu0 0.0
        %2346 = vmatpush1.msra.mxu0 0.0
        %2347 = vmatprep.subr.mxu0 0.0
        %2348 = vmatpush1.msra.mxu0 0.0
        %2349 = vmatprep.subr.mxu0 0.0
        %2350 = vmatpush1.msra.mxu0 0.0
        %2351 = vmatprep.subr.mxu0 0.0
        %2352 = vmatpush1.msra.mxu0 0.0
        %2353 = vmatprep.subr.mxu0 0.0
        %2354 = vmatpush1.msra.mxu0 0.0
        %2355 = vmatprep.subr.mxu0 0.0
        %2356 = vmatpush1.msra.mxu0 0.0
        %2357 = vmatprep.subr.mxu0 0.0
        %2358 = vmatpush1.msra.mxu0 0.0
        %2359 = vmatprep.subr.mxu0 0.0
        %2360 = vmatpush1.msra.mxu0 0.0
        %2361 = vmatprep.subr.mxu0 0.0
        %2362 = vmatpush1.msra.mxu0 0.0
        %2363 = vmatprep.subr.mxu0 0.0
        %2364 = vmatpush1.msra.mxu0 0.0
        %2365 = vmatprep.subr.mxu0 0.0
        %2366 = vmatpush1.msra.mxu0 0.0
        %2367 = vmatprep.subr.mxu0 0.0
        %2368 = vmatpush1.msra.mxu0 0.0
        %2369 = vmatprep.mubr.f32.mxu0 0.0
        %v2370 = vand.u32 %v1469, 4294901760
        %2371 = vmatmul.mubr.f32.gmra.mrb[0].mxu0 %v2370
        %v2372 = vpop.f32.mrb[0].mxu0
        %v2373 = vadd.f32 %v2289, %v2372
        %v2374 = vpop.f32.mrb[0].mxu0
        %v2375 = vadd.f32 %v2291, %v2374
        %2376 = vdwg.mxu0
        %v2377 = vand.u32 %v1456, 4294901760
        %2378 = vmatprep.subr.mxu0 %v2377
        %v2379 = vand.u32 %v1455, 4294901760
        %2380 = vmatpush1.msra.mxu0 %v2379
        %v2381 = vand.u32 %v1460, 4294901760
        %2382 = vmatprep.subr.mxu0 %v2381
        %v2383 = vand.u32 %v1459, 4294901760
        %2384 = vmatpush1.msra.mxu0 %v2383
        %2385 = vmatprep.subr.mxu0 0.0
        %2386 = vmatpush1.msra.mxu0 0.0
        %2387 = vmatprep.subr.mxu0 0.0
        %2388 = vmatpush1.msra.mxu0 0.0
        %2389 = vmatprep.subr.mxu0 0.0
        %2390 = vmatpush1.msra.mxu0 0.0
        %2391 = vmatprep.subr.mxu0 0.0
        %2392 = vmatpush1.msra.mxu0 0.0
        %2393 = vmatprep.subr.mxu0 0.0
        %2394 = vmatpush1.msra.mxu0 0.0
        %2395 = vmatprep.subr.mxu0 0.0
        %2396 = vmatpush1.msra.mxu0 0.0
        %2397 = vmatprep.subr.mxu0 0.0
        %2398 = vmatpush1.msra.mxu0 0.0
        %2399 = vmatprep.subr.mxu0 0.0
        %2400 = vmatpush1.msra.mxu0 0.0
        %2401 = vmatprep.subr.mxu0 0.0
        %2402 = vmatpush1.msra.mxu0 0.0
        %2403 = vmatprep.subr.mxu0 0.0
        %2404 = vmatpush1.msra.mxu0 0.0
        %2405 = vmatprep.subr.mxu0 0.0
        %2406 = vmatpush1.msra.mxu0 0.0
        %2407 = vmatprep.subr.mxu0 0.0
        %2408 = vmatpush1.msra.mxu0 0.0
        %2409 = vmatprep.subr.mxu0 0.0
        %2410 = vmatpush1.msra.mxu0 0.0
        %2411 = vmatprep.subr.mxu0 0.0
        %2412 = vmatpush1.msra.mxu0 0.0
        %2413 = vmatprep.subr.mxu0 0.0
        %2414 = vmatpush1.msra.mxu0 0.0
        %2415 = vmatprep.subr.mxu0 0.0
        %2416 = vmatpush1.msra.mxu0 0.0
        %2417 = vmatprep.subr.mxu0 0.0
        %2418 = vmatpush1.msra.mxu0 0.0
        %2419 = vmatprep.subr.mxu0 0.0
        %2420 = vmatpush1.msra.mxu0 0.0
        %2421 = vmatprep.subr.mxu0 0.0
        %2422 = vmatpush1.msra.mxu0 0.0
        %2423 = vmatprep.subr.mxu0 0.0
        %2424 = vmatpush1.msra.mxu0 0.0
        %2425 = vmatprep.subr.mxu0 0.0
        %2426 = vmatpush1.msra.mxu0 0.0
        %2427 = vmatprep.subr.mxu0 0.0
        %2428 = vmatpush1.msra.mxu0 0.0
        %2429 = vmatprep.subr.mxu0 0.0
        %2430 = vmatpush1.msra.mxu0 0.0
        %2431 = vmatprep.subr.mxu0 0.0
        %2432 = vmatpush1.msra.mxu0 0.0
        %2433 = vmatprep.subr.mxu0 0.0
        %2434 = vmatpush1.msra.mxu0 0.0
        %2435 = vmatprep.subr.mxu0 0.0
        %2436 = vmatpush1.msra.mxu0 0.0
        %2437 = vmatprep.subr.mxu0 0.0
        %2438 = vmatpush1.msra.mxu0 0.0
        %2439 = vmatprep.subr.mxu0 0.0
        %2440 = vmatpush1.msra.mxu0 0.0
        %2441 = vmatprep.subr.mxu0 0.0
        %2442 = vmatpush1.msra.mxu0 0.0
        %2443 = vmatprep.subr.mxu0 0.0
        %2444 = vmatpush1.msra.mxu0 0.0
        %2445 = vmatprep.mubr.f32.mxu0 0.0
        %v2446 = vand.u32 %v1469, 4294901760
        %2447 = vmatmul.mubr.f32.gmra.mrb[0].mxu0 %v2446
        %v2448 = vpop.f32.mrb[0].mxu0
        %v2449 = vadd.f32 %v2373, %v2448
        %v2450 = vpop.f32.mrb[0].mxu0
        %v2451 = vadd.f32 %v2375, %v2450
        %2452 = vdwg.mxu0
        %v2453 = vtanh.pop %v1958
        %v2454 = vtanh.pop %v1960
        %v2455 = vtanh.pop %v2449
        %v2456 = vtanh.pop %v2451
        %v2457 = vmul.f32 %v2453, 1.442695
        %v2458 = vpow.pop %v2457
        %v2459 = vmul.f32 %v2454, 1.442695
        %v2460 = vpow.pop %v2459
        %v2461 = vmul.f32 %v2455, 1.442695
        %v2462 = vpow.pop %v2461
        %v2463 = vmul.f32 %v2456, 1.442695
        %v2464 = vpow.pop %v2463
        %v2466 = vlaneseq
        %v2467 = vshrl.u32 %v2466, 7
        %v2468 = vsub.s32 0, %v2467
        %v2469 = vrot.slane %v280, %v2468
        %v2470 = vlaneseq
        %v2471 = vshrl.u32 %v2470, 7
        %v2472 = vsub.s32 1, %v2471
        %v2473 = vrot.slane %v280, %v2472
        %v2474 = vlaneseq
        %v2475 = vshrl.u32 %v2474, 7
        %v2476 = vsub.s32 2, %v2475
        %v2477 = vrot.slane %v280, %v2476
        %v2478 = vlaneseq
        %v2479 = vshrl.u32 %v2478, 7
        %v2480 = vsub.s32 3, %v2479
        %v2481 = vrot.slane %v280, %v2480
        %v2486 = vmul.f32 %v2458, %v2469
        %v2487 = vmul.f32 %v2460, %v2473
        %v2488 = vmul.f32 %v2462, %v2477
        %v2489 = vmul.f32 %v2464, %v2481
        %v2494 = vrot.slane %v2486, 1
        %v2495 = vrot.slane %v2487, 1
        %v2496 = vrot.slane %v2488, 1
        %v2497 = vrot.slane %v2489, 1
        %v2502 = vadd.f32 %v2453, %v2494
        %v2503 = vadd.f32 %v2454, %v2495
        %v2504 = vadd.f32 %v2455, %v2496
        %v2505 = vadd.f32 %v2456, %v2497
        %v2506 = vmul.f32 %v2453, 2.0
        %v2507 = vmul.f32 %v2454, 2.0
        %v2508 = vmul.f32 %v2455, 2.0
        %v2509 = vmul.f32 %v2456, 2.0
        %vm2510 = vcmask 1040384
        %v2511 = vsel %vm2510, %v2502, %v2506
        %v2512 = vsel %vm2510, %v2503, %v2507
        %v2513 = vsel %vm2510, %v2504, %v2508
        %v2514 = vsel %vm2510, %v2505, %v2509
        %v2519 = vcombine.low %v2511, %v2512
        %v2520 = vcombine.low %v2513, %v2514
        %v2522 = vunpack.c.l.s4 1983009808
        %v2523 = vunpack.c.0.s8 %v2522
        %v2524 = vlaneseq
        %v2525 = vshrl.u32 %v2524, 7
        %v2526 = vsub.s32 %v2523, %v2525
        %v2527 = vrot.slane %v2519, %v2526
        %v2529 = vunpack.c.l.s4 1983009808
        %v2530 = vunpack.c.0.s8 %v2529
        %v2531 = vlaneseq
        %v2532 = vshrl.u32 %v2531, 7
        %v2533 = vsub.s32 %v2530, %v2532
        %v2534 = vrot.slane %v2520, %v2533
        %v2535 = vcombine.low %v2527, %v2534
        %2537 = vst [vmem:[%s272] sm:$0xff] %v2535
        %s2538 = sand.u32 %s181, 1
        %s2539 = scalar_lea.sflag [#allocation3], %s2538
        %s2540 = sand.u32 %s181, 1
        %s2541 = smul.addr %s2540, 8
        %s2542 = scalar_lea.vmem [#allocation2], %s2541
        // Predicated region
        $region49: #{tpu_custom_call.1} parent=47 // pred_check
          %p2543 = pneg %p191
        $region50: #{tpu_custom_call.1} parent=47 // pred_check_branch
          %2545 = sbr.rel (%p2543) target = $region52
        $region51: #{tpu_custom_call.1} parent=47 // pred_region
          %s2546 = smul.u32 4, %s21
          %s2548 = ssub.s32 128, 128
          %2549 = vsyncadd %s2539, %s2548
          %s2550 = smul.addr %s2546, 32
          %s2551 = scalar_lea.hbm %s7, %s2550
          %s2553 = sshll.u32 %s2542, 4
          %s2554 = int_to_ptr.vmem [resolvable:$true] %s2553
          %2556 = dma.vmem_to_hbm [thread:$0]  %s2554, 128, %s2551, %s2539
        $region52: #{tpu_custom_call.1} parent=47 // pred_fallthru
          _
      $region48: #{tpu_custom_call.1} parent=5 // pred_fallthru
        _
      %p2557 = scmp.le.s32.totalorder 2, %s16
      // Predicated region
      $region53: #{tpu_custom_call.1} parent=5 // pred_check
        %p2558 = pneg %p2557
      $region54: #{tpu_custom_call.1} parent=5 // pred_check_branch
        %2560 = sbr.rel (%p2558) target = $region56
      $region55: #{tpu_custom_call.1} parent=5 // pred_region
        %s2561 = ssub.s32 %s16, 2
        // Predicated region
        $region57: #{tpu_custom_call.1} parent=55 // pred_check
          %p2562 = pneg %p197
        $region58: #{tpu_custom_call.1} parent=55 // pred_check_branch
          %2564 = sbr.rel (%p2562) target = $region60
        $region59: #{tpu_custom_call.1} parent=55 // pred_region
          %s2565 = sand.u32 %s182, 1
          %s2566 = scalar_lea.sflag [#allocation3], %s2565
          %s2567 = sand.u32 %s182, 1
          %s2568 = smul.addr %s2567, 8
          %s2569 = scalar_lea.vmem [#allocation2], %s2568
          %2570 = dma.done %s2566, 128
        $region60: #{tpu_custom_call.1} parent=55 // pred_fallthru
          _
      $region56: #{tpu_custom_call.1} parent=5 // pred_fallthru
        _
    $region6: #{tpu_custom_call.1} parent=1 // loop_footer
      %s20 = sadd.s32 1, %s16
    $region7: #{tpu_custom_call.1} parent=1 // loop_footer_branch
      %15 = sbr.rel target = $region3
    $region8: #{tpu_custom_call.1} parent=1 // loop_exit
      _
    %2571 = vsyncpa [#allocation3], 1
    %s2572 = scalar_lea.sflag [#allocation3], 1
    %2573 = vsyncpa %s2572, 1

</llo_original>
